<compile_context>
chip_gen: v6e
topology: v6e:2x2x1
jax: 0.10.0
libtpu: 0.0.40
codegen_flags: <defaults>
</compile_context>

<pallas_src>
import functools

import jax
import jax.numpy as jnp
from jax.experimental import pallas as pl
from jax.experimental.pallas import tpu as pltpu


BN_EPS = 1e-5


def _round_up(x, m):
    return ((x + m - 1) // m) * m


def _pick_div(n, ladder):
    for t in ladder:
        if n % t == 0:
            return t
    lim = min(n, max(ladder))
    for d in range(lim, 0, -1):
        if n % d == 0:
            return d
    return n


def _pick_rows(m, c, itemsize=4, budget=1 << 20):
    """Largest row-tile dividing m that keeps the block under ~1 MiB; never
    falls back to the whole array for awkward m."""
    cap = max(8, budget // max(1, c * itemsize))
    for t in (1024, 512, 256, 128, 64, 32, 16, 8):
        if t <= cap and m % t == 0:
            return t
    lim = min(m, cap)
    for d in range(lim, 0, -1):
        if m % d == 0:
            return d
    return m


# --------------------------------------------------------------------------
# Matmul kernels (bf16 operands, f32 MXU accumulation, single full-K block).
# Optional fused per-block BN partial statistics (sum / sumsq) epilogue.
# --------------------------------------------------------------------------
def _mm_kernel(a_ref, b_ref, o_ref):
    o_ref[...] = jnp.dot(a_ref[...], b_ref[...],
                         preferred_element_type=jnp.float32).astype(o_ref.dtype)


def _mm_bias_kernel(a_ref, b_ref, c_ref, o_ref):
    acc = jnp.dot(a_ref[...], b_ref[...], preferred_element_type=jnp.float32)
    o_ref[...] = (acc + c_ref[...]).astype(o_ref.dtype)


def _mm_stats_kernel(a_ref, b_ref, o_ref, ps_ref, pq_ref):
    acc = jnp.dot(a_ref[...], b_ref[...], preferred_element_type=jnp.float32)
    o_ref[...] = acc.astype(o_ref.dtype)
    tn = acc.shape[1]
    ps_ref[...] = jnp.sum(acc, axis=0, keepdims=True).reshape(1, 1, tn)
    pq_ref[...] = jnp.sum(acc * acc, axis=0, keepdims=True).reshape(1, 1, tn)


def pallas_matmul(a, b, bias=None, out_dtype=jnp.bfloat16, with_stats=False):
    """C = A @ B (+ bias).  A is bf16 activations, B a pre-packed bf16 weight
    matrix.  K (<= 2048 after removing the 3x3 im2col path) is one full block,
    so there is no reduction axis; both grid axes are 'parallel'.  When
    with_stats=True two extra per-block partial-stat rows are emitted
    (column sum and sum of squares in f32) for the following BatchNorm."""
    M, K = a.shape
    K2, N = b.shape
    assert K == K2, (K, K2)
    tm = _pick_div(M, (512, 256, 128, 64, 32, 16, 8))
    tn = _pick_div(N, (256, 128))
    mb, nb = M // tm, N // tn
    in_specs = [pl.BlockSpec((tm, K), lambda i, j: (i, 0)),
                pl.BlockSpec((K, tn), lambda i, j: (0, j))]
    args = [a, b]
    if with_stats:
        assert bias is None
        kern = _mm_stats_kernel
        out_shape = (jax.ShapeDtypeStruct((M, N), out_dtype),
                     jax.ShapeDtypeStruct((mb, 1, N), jnp.float32),
                     jax.ShapeDtypeStruct((mb, 1, N), jnp.float32))
        out_specs = (pl.BlockSpec((tm, tn), lambda i, j: (i, j)),
                     pl.BlockSpec((1, 1, tn), lambda i, j: (i, 0, j)),
                     pl.BlockSpec((1, 1, tn), lambda i, j: (i, 0, j)))
    elif bias is not None:
        kern = _mm_bias_kernel
        in_specs.append(pl.BlockSpec((1, tn), lambda i, j: (0, j)))
        args.append(bias.reshape(1, N).astype(jnp.float32))
        out_shape = jax.ShapeDtypeStruct((M, N), out_dtype)
        out_specs = pl.BlockSpec((tm, tn), lambda i, j: (i, j))
    else:
        kern = _mm_kernel
        out_shape = jax.ShapeDtypeStruct((M, N), out_dtype)
        out_specs = pl.BlockSpec((tm, tn), lambda i, j: (i, j))
    return pl.pallas_call(
        kern,
        out_shape=out_shape,
        grid_spec=pltpu.PrefetchScalarGridSpec(
            num_scalar_prefetch=0,
            grid=(mb, nb),
            in_specs=in_specs,
            out_specs=out_specs),
        compiler_params=pltpu.CompilerParams(
            dimension_semantics=("parallel", "parallel")),
    )(*args)


# --------------------------------------------------------------------------
# 3x3 convolution (stride 1 or 2): one halo DMA per M-block, double-buffered,
# 9 tap matmuls accumulated locally, single bf16 store, fused masked BN stats.
# --------------------------------------------------------------------------
def _conv3x3_kernel(x_hbm, w_ref, m_ref, o_ref, ps_ref, pq_ref,
                    halo_buf, sems, *, shifts, tm, mb):
    i = pl.program_id(0)
    j = pl.program_id(1)
    cin = halo_buf.shape[2]
    rows = halo_buf.shape[1]

    def start_fetch(blk, slot):
        pltpu.make_async_copy(x_hbm.at[pl.ds(blk * tm, rows), :],
                              halo_buf.at[slot], sems.at[slot]).start()

    def wait_fetch(slot):
        pltpu.make_async_copy(x_hbm.at[pl.ds(0, rows), :],
                              halo_buf.at[slot], sems.at[slot]).wait()

    # Prime the very first halo (exposed exactly once).
    @pl.when((i == 0) & (j == 0))
    def _():
        start_fetch(0, 0)

    # Per M-block: wait for its halo, then prefetch the next block's halo
    # into the other slot so the transfer overlaps this block's compute.
    @pl.when(j == 0)
    def _():
        wait_fetch(i % 2)

        @pl.when(i + 1 < mb)
        def _():
            start_fetch(i + 1, (i + 1) % 2)

    slot = i % 2
    # Accumulate the 9 tap matmuls into a local f32 value (no RMW on o_ref).
    # TODO(synk): for Cin=64 (layer1) the per-tap K is below the MXU
    # contraction tile; a (tm, 9*Cin) tap-gather + single long-K dot would
    # improve MXU cadence there.
    acc = jnp.dot(halo_buf[slot, pl.ds(shifts[0], tm), :], w_ref[0:cin, :],
                  preferred_element_type=jnp.float32)
    for t in range(1, len(shifts)):
        acc += jnp.dot(halo_buf[slot, pl.ds(shifts[t], tm), :],
                       w_ref[t * cin:(t + 1) * cin, :],
                       preferred_element_type=jnp.float32)
    o_ref[...] = acc.astype(o_ref.dtype)

    # Masked partial BN statistics (mask excludes padded / garbage rows).
    am = acc * m_ref[...]
    tn = acc.shape[1]
    ps_ref[...] = jnp.sum(am, axis=0, keepdims=True).reshape(1, 1, tn)
    pq_ref[...] = jnp.sum(am * acc, axis=0, keepdims=True).reshape(1, 1, tn)


def conv3x3(x, w_packed, stride=1):
    """3x3 / pad 1 conv on NHWC bf16 input (stride 1 or 2).  The conv is
    evaluated at every padded spatial position of the flattened input (so the
    9 tap offsets are constant); border / off-stride rows are garbage and are
    cropped afterwards.  BN partial statistics are fused into the epilogue
    (restricted to the valid strided output rows via a per-row mask)."""
    N, H, W, C = x.shape
    Hp, Wp = H + 2, W + 2
    cout = w_packed.shape[1]
    OH = (H + 2 - 3) // stride + 1
    OW = (W + 2 - 3) // stride + 1
    xp = jnp.pad(x, ((0, 0), (1, 1), (1, 1), (0, 0)))
    mflat = N * Hp * Wp
    tm = 256 if mflat >= 256 else _round_up(mflat, 16)
    mb = (mflat + tm - 1) // tm
    halo_r = _round_up(2 * Wp + 2, 8)
    mx = mb * tm + halo_r
    xflat = jnp.pad(xp.reshape(mflat, C), ((0, mx - mflat), (0, 0)))

    # Validity mask: 1.0 at flat rows corresponding to (strided) output rows.
    mh = (jnp.arange(Hp) % stride == 0) & (jnp.arange(Hp) < stride * OH)
    mw = (jnp.arange(Wp) % stride == 0) & (jnp.arange(Wp) < stride * OW)
    mask4 = (mh[None, :, None, None] & mw[None, None, :, None])
    mask4 = jnp.broadcast_to(mask4, (N, Hp, Wp, 1)).astype(jnp.float32)
    mask = jnp.pad(mask4.reshape(mflat, 1), ((0, mb * tm - mflat), (0, 0)))

    tn = _pick_div(cout, (256, 128))
    nb = cout // tn
    shifts = tuple(di * Wp + dj for di in range(3) for dj in range(3))
    kern = functools.partial(_conv3x3_kernel, shifts=shifts, tm=tm, mb=mb)
    y, ps, pq = pl.pallas_call(
        kern,
        out_shape=(jax.ShapeDtypeStruct((mb * tm, cout), jnp.bfloat16),
                   jax.ShapeDtypeStruct((mb, 1, cout), jnp.float32),
                   jax.ShapeDtypeStruct((mb, 1, cout), jnp.float32)),
        grid_spec=pltpu.PrefetchScalarGridSpec(
            num_scalar_prefetch=0,
            grid=(mb, nb),
            in_specs=[pl.BlockSpec(memory_space=pl.ANY),
                      pl.BlockSpec((9 * C, tn), lambda i, j: (0, j)),
                      pl.BlockSpec((tm, 1), lambda i, j: (i, 0))],
            out_specs=(pl.BlockSpec((tm, tn), lambda i, j: (i, j)),
                       pl.BlockSpec((1, 1, tn), lambda i, j: (i, 0, j)),
                       pl.BlockSpec((1, 1, tn), lambda i, j: (i, 0, j))),
            scratch_shapes=[pltpu.VMEM((2, tm + halo_r, C), jnp.bfloat16),
                            pltpu.SemaphoreType.DMA((2,))]),
        # 'arbitrary' on both axes: the manual prefetch chain across M-blocks
        # requires sequential grid traversal.
        compiler_params=pltpu.CompilerParams(
            dimension_semantics=("arbitrary", "arbitrary")),
    )(xflat, w_packed, mask)
    y4 = y[:mflat].reshape(N, Hp, Wp, cout)
    y4 = y4[:, 0:stride * OH:stride, 0:stride * OW:stride, :]
    return y4, ps, pq, float(N * OH * OW)


# --------------------------------------------------------------------------
# Stem 7x7 s2 conv via bf16 im2col (only conv left on the im2col path)
# --------------------------------------------------------------------------
def conv_stem(x, w_packed, kh=7, kw=7, stride=2, pad=3):
    N, H, W, C = x.shape
    xp = jnp.pad(x, ((0, 0), (pad, pad), (pad, pad), (0, 0)))
    OH = (H + 2 * pad - kh) // stride + 1
    OW = (W + 2 * pad - kw) // stride + 1
    cols = [xp[:, i:i + OH * stride:stride, j:j + OW * stride:stride, :]
            for i in range(kh) for j in range(kw)]
    a = jnp.concatenate(cols, axis=-1).reshape(N * OH * OW, kh * kw * C)
    if w_packed.shape[0] != a.shape[1]:                 # stem K padded to 16
        a = jnp.pad(a, ((0, 0), (0, w_packed.shape[0] - a.shape[1])))
    y, ps, pq = pallas_matmul(a, w_packed, with_stats=True)
    return y.reshape(N, OH, OW, -1), ps, pq, float(N * OH * OW)


def conv1x1(x, w_packed, stride=1):
    # TODO(synk): fold the stride-2 subsample into the matmul A index_map
    # instead of a separate strided-slice copy.
    if stride != 1:
        x = x[:, ::stride, ::stride, :]
    N, H, W, C = x.shape
    y, ps, pq = pallas_matmul(x.reshape(N * H * W, C), w_packed,
                              with_stats=True)
    return y.reshape(N, H, W, -1), ps, pq, float(N * H * W)


# --------------------------------------------------------------------------
# BatchNorm: scale/shift from the conv-fused partial stats + fused
# affine(+residual)(+ReLU) normalize kernel.
# --------------------------------------------------------------------------
def _affine_kernel(x_ref, s_ref, b_ref, o_ref, *, relu):
    y = x_ref[...].astype(jnp.float32) * s_ref[...] + b_ref[...]
    if relu:
        y = jnp.maximum(y, 0.0)
    o_ref[...] = y.astype(o_ref.dtype)


def pallas_affine(x2d, scale, shift, relu, out_dtype=jnp.bfloat16):
    M, C = x2d.shape
    tm = _pick_rows(M, C, 4)
    kern = functools.partial(_affine_kernel, relu=relu)
    return pl.pallas_call(
        kern,
        out_shape=jax.ShapeDtypeStruct((M, C), out_dtype),
        grid_spec=pltpu.PrefetchScalarGridSpec(
            num_scalar_prefetch=0,
            grid=(M // tm,),
            in_specs=[pl.BlockSpec((tm, C), lambda i: (i, 0)),
                      pl.BlockSpec((1, C), lambda i: (0, 0)),
                      pl.BlockSpec((1, C), lambda i: (0, 0))],
            out_specs=pl.BlockSpec((tm, C), lambda i: (i, 0))),
        compiler_params=pltpu.CompilerParams(
            dimension_semantics=("parallel",)),
    )(x2d, scale.reshape(1, C).astype(jnp.float32),
      shift.reshape(1, C).astype(jnp.float32))


def _affine_res_kernel(x_ref, r_ref, sx_ref, bx_ref, sr_ref, br_ref, o_ref, *,
                       relu):
    y = x_ref[...].astype(jnp.float32) * sx_ref[...] + bx_ref[...]
    y = y + r_ref[...].astype(jnp.float32) * sr_ref[...] + br_ref[...]
    if relu:
        y = jnp.maximum(y, 0.0)
    o_ref[...] = y.astype(o_ref.dtype)


def pallas_affine_residual(x2d, r2d, sx, bx, sr, br, relu=True,
                           out_dtype=jnp.bfloat16):
    M, C = x2d.shape
    tm = _pick_rows(M, C, 4)
    kern = functools.partial(_affine_res_kernel, relu=relu)
    row = pl.BlockSpec((tm, C), lambda i: (i, 0))
    vec = pl.BlockSpec((1, C), lambda i: (0, 0))
    return pl.pallas_call(
        kern,
        out_shape=jax.ShapeDtypeStruct((M, C), out_dtype),
        grid_spec=pltpu.PrefetchScalarGridSpec(
            num_scalar_prefetch=0,
            grid=(M // tm,),
            in_specs=[row, row, vec, vec, vec, vec],
            out_specs=row),
        compiler_params=pltpu.CompilerParams(
            dimension_semantics=("parallel",)),
    )(x2d, r2d,
      sx.reshape(1, C).astype(jnp.float32),
      bx.reshape(1, C).astype(jnp.float32),
      sr.reshape(1, C).astype(jnp.float32),
      br.reshape(1, C).astype(jnp.float32))


def _bn_scale_shift(stat_sum, stat_sq, m_rows, gamma, beta, eps=BN_EPS):
    # NOTE: single-pass E[x^2]-E[x]^2 (sums accumulated in f32); variance is
    # clamped at 0 to guard against cancellation.
    mean = stat_sum / m_rows
    var = jnp.maximum(stat_sq / m_rows - mean * mean, 0.0)
    scale = gamma * jax.lax.rsqrt(var + eps)
    shift = beta - mean * scale
    return scale, shift


def batchnorm_relu(conv_out, gamma, beta, relu=True):
    """Training-mode BatchNorm (biased batch stats) + optional ReLU, consuming
    the conv-fused partial statistics.  C<128 tensors are viewed lane-dense
    as (M/f, f*C) so the normalize kernel stores full 128-lane vregs."""
    y4, ps, pq, cnt = conv_out
    N, H, W, C = y4.shape
    M = N * H * W
    scale, shift = _bn_scale_shift(jnp.sum(ps, axis=(0, 1)),
                                   jnp.sum(pq, axis=(0, 1)),
                                   cnt, gamma, beta)
    f = 1
    if C < 128 and 128 % C == 0 and M % (128 // C) == 0:
        f = 128 // C
    xv = y4.reshape(M // f, C * f)
    y = pallas_affine(xv, jnp.tile(scale, f), jnp.tile(shift, f), relu=relu)
    return y.reshape(N, H, W, C)


def batchnorm_add_relu(main, bn_x, res, bn_res):
    """Fused bn3 normalize + (optionally bn-normalized) residual add + ReLU."""
    y4, ps, pq, cnt = main
    N, H, W, C = y4.shape
    M = N * H * W
    sx, bx = _bn_scale_shift(jnp.sum(ps, axis=(0, 1)),
                             jnp.sum(pq, axis=(0, 1)), cnt, bn_x[0], bn_x[1])
    if bn_res is not None:
        r4, rps, rpq, rcnt = res
        sr, br = _bn_scale_shift(jnp.sum(rps, axis=(0, 1)),
                                 jnp.sum(rpq, axis=(0, 1)),
                                 rcnt, bn_res[0], bn_res[1])
        r2 = r4.reshape(M, C)
    else:
        r2 = res.reshape(M, C)
        sr = jnp.ones((C,), jnp.float32)
        br = jnp.zeros((C,), jnp.float32)
    y = pallas_affine_residual(y4.reshape(M, C), r2, sx, bx, sr, br, relu=True)
    return y.reshape(N, H, W, C)


# --------------------------------------------------------------------------
# MaxPool 3x3 / stride 2 / pad 1: halo DMA (double-buffered), max in VMEM.
# --------------------------------------------------------------------------
def _maxpool_kernel(x_hbm, o_ref, halo_buf, sems, *, shifts, tm, mb):
    i = pl.program_id(0)
    rows = halo_buf.shape[1]

    def start_fetch(blk, slot):
        pltpu.make_async_copy(x_hbm.at[pl.ds(blk * tm, rows), :],
                              halo_buf.at[slot], sems.at[slot]).start()

    def wait_fetch(slot):
        pltpu.make_async_copy(x_hbm.at[pl.ds(0, rows), :],
                              halo_buf.at[slot], sems.at[slot]).wait()

    @pl.when(i == 0)
    def _():
        start_fetch(0, 0)

    wait_fetch(i % 2)

    @pl.when(i + 1 < mb)
    def _():
        start_fetch(i + 1, (i + 1) % 2)

    slot = i % 2
    m = halo_buf[slot, pl.ds(shifts[0], tm), :]
    for t in range(1, len(shifts)):
        m = jnp.maximum(m, halo_buf[slot, pl.ds(shifts[t], tm), :])
    o_ref[...] = m


def maxpool2d_3x3_s2(x):
    N, H, W, C = x.shape
    Hp, Wp = H + 2, W + 2
    OH = (H + 2 - 3) // 2 + 1
    OW = (W + 2 - 3) // 2 + 1
    xp = jnp.pad(x, ((0, 0), (1, 1), (1, 1), (0, 0)),
                 constant_values=-jnp.inf)
    mflat = N * Hp * Wp
    tm = 256 if mflat >= 256 else _round_up(mflat, 16)
    mb = (mflat + tm - 1) // tm
    halo_r = _round_up(2 * Wp + 2, 8)
    mx = mb * tm + halo_r
    xflat = jnp.pad(xp.reshape(mflat, C), ((0, mx - mflat), (0, 0)))
    shifts = tuple(di * Wp + dj for di in range(3) for dj in range(3))
    kern = functools.partial(_maxpool_kernel, shifts=shifts, tm=tm, mb=mb)
    y = pl.pallas_call(
        kern,
        out_shape=jax.ShapeDtypeStruct((mb * tm, C), x.dtype),
        grid_spec=pltpu.PrefetchScalarGridSpec(
            num_scalar_prefetch=0,
            grid=(mb,),
            in_specs=[pl.BlockSpec(memory_space=pl.ANY)],
            out_specs=pl.BlockSpec((tm, C), lambda i: (i, 0)),
            scratch_shapes=[pltpu.VMEM((2, tm + halo_r, C), x.dtype),
                            pltpu.SemaphoreType.DMA((2,))]),
        compiler_params=pltpu.CompilerParams(
            dimension_semantics=("arbitrary",)),
    )(xflat)
    # TODO(synk): emit the stride-2 output directly in-kernel instead of
    # writing the full-resolution max map and strided-slicing it here.
    return y[:mflat].reshape(N, Hp, Wp, C)[:, 0:2 * OH:2, 0:2 * OW:2, :]


# --------------------------------------------------------------------------
# Global average pool (tiled over channels)
# --------------------------------------------------------------------------
def _gap_kernel(x_ref, o_ref, *, inv_hw):
    for b in range(x_ref.shape[0]):
        s = jnp.sum(x_ref[b].astype(jnp.float32), axis=0, keepdims=True)
        o_ref[b:b + 1, :] = (s * inv_hw).astype(o_ref.dtype)


def pallas_global_avgpool(x4d, out_dtype=jnp.bfloat16):
    N, H, W, C = x4d.shape
    x3 = x4d.reshape(N, H * W, C)
    tc = _pick_div(C, (512, 256, 128))
    kern = functools.partial(_gap_kernel, inv_hw=1.0 / (H * W))
    return pl.pallas_call(
        kern,
        out_shape=jax.ShapeDtypeStruct((N, C), out_dtype),
        grid_spec=pltpu.PrefetchScalarGridSpec(
            num_scalar_prefetch=0,
            grid=(C // tc,),
            in_specs=[pl.BlockSpec((N, H * W, tc), lambda j: (0, 0, j))],
            out_specs=pl.BlockSpec((N, tc), lambda j: (0, j))),
        compiler_params=pltpu.CompilerParams(
            dimension_semantics=("parallel",)),
    )(x3)


# --------------------------------------------------------------------------
# ResNet-50 forward
# --------------------------------------------------------------------------
def bottleneck(x, p):
    out = batchnorm_relu(conv1x1(x, p['conv1']), *p['bn1'])
    out = batchnorm_relu(conv3x3(out, p['conv2'], stride=p['stride']),
                         *p['bn2'])
    main = conv1x1(out, p['conv3'])
    if 'down_conv' in p:
        identity = conv1x1(x, p['down_conv'], stride=p['stride'])
        return batchnorm_add_relu(main, p['bn3'], identity, p['down_bn'])
    return batchnorm_add_relu(main, p['bn3'], x, None)


def resnet_forward(p, x_nchw):
    # layout: accept NCHW (PyTorch convention); transpose + cast bf16 once.
    x = jnp.transpose(x_nchw, (0, 2, 3, 1)).astype(jnp.bfloat16)
    x = batchnorm_relu(conv_stem(x, p['conv1']), *p['bn1'])   # stem + bn+relu
    x = maxpool2d_3x3_s2(x)
    for layer in p['layers']:
        for blk in layer:
            x = bottleneck(x, blk)
    pooled = pallas_global_avgpool(x)                         # (N, 2048) bf16
    logits = pallas_matmul(pooled, p['fc_w'], bias=p['fc_b'],
                           out_dtype=jnp.float32)             # (N, 128) lanes
    return logits[:, :p['num_classes']]


# --------------------------------------------------------------------------
# Deterministic parameter init (torch layout) + one-time bf16 weight packing
# --------------------------------------------------------------------------
def _kaiming(key, shape):
    fan_in = shape[1] * shape[2] * shape[3]
    std = (2.0 / fan_in) ** 0.5
    return jax.random.normal(key, shape, jnp.float32) * std


def _bn_init(c):
    return (jnp.ones((c,), jnp.float32), jnp.zeros((c,), jnp.float32))


def init_resnet50_params(key, input_dim=3, num_classes=1000):
    cfg = [(64, 3, 1), (128, 4, 2), (256, 6, 2), (512, 3, 2)]
    params = {}
    key, k = jax.random.split(key)
    params['conv1'] = _kaiming(k, (64, input_dim, 7, 7))
    params['bn1'] = _bn_init(64)
    inplanes = 64
    layers = []
    for planes, nblocks, stride in cfg:
        layer = []
        for b in range(nblocks):
            s = stride if b == 0 else 1
            key, k1, k2, k3 = jax.random.split(key, 4)
            p = {
                'conv1': _kaiming(k1, (planes, inplanes, 1, 1)),
                'bn1': _bn_init(planes),
                'conv2': _kaiming(k2, (planes, planes, 3, 3)),
                'bn2': _bn_init(planes),
                'conv3': _kaiming(k3, (planes * 4, planes, 1, 1)),
                'bn3': _bn_init(planes * 4),
                'stride': s,
            }
            if s != 1 or inplanes != planes * 4:
                key, kd = jax.random.split(key)
                p['down_conv'] = _kaiming(kd, (planes * 4, inplanes, 1, 1))
                p['down_bn'] = _bn_init(planes * 4)
            layer.append(p)
            inplanes = planes * 4
        layers.append(layer)
    params['layers'] = layers
    key, kw, kb = jax.random.split(key, 3)
    params['fc_w'] = jax.random.normal(kw, (num_classes, 512 * 4),
                                       jnp.float32) / jnp.sqrt(512 * 4.0)
    params['fc_b'] = jax.random.normal(kb, (num_classes,), jnp.float32) * 0.01
    return params


def pack_params(params):
    """One-time weight packing: bf16, matmul layout.  3x3 weights are packed
    tap-major (kh*kw outer, Cin inner) and NOT K-padded (the conv3x3 kernel
    slices per-tap rows); the stem is K-padded to 16; the FC head is padded
    to 128 lane-dense output columns."""
    def pack1x1(w):                                   # (O, I, 1, 1) -> (I, O)
        o, i = w.shape[0], w.shape[1]
        return w.reshape(o, i).T.astype(jnp.bfloat16)

    def pack3x3(w):                                   # (O, I, 3, 3) -> (9I, O)
        o, i, kh, kw = w.shape
        return jnp.transpose(w, (2, 3, 1, 0)).reshape(kh * kw * i,
                                                      o).astype(jnp.bfloat16)

    def pack_stem(w):                                 # (O, I, 7, 7)
        o, i, kh, kw = w.shape
        m = jnp.transpose(w, (2, 3, 1, 0)).reshape(kh * kw * i, o)
        kp = _round_up(kh * kw * i, 16)
        if kp != kh * kw * i:
            m = jnp.pad(m, ((0, kp - kh * kw * i), (0, 0)))
        return m.astype(jnp.bfloat16)

    num_classes = params['fc_w'].shape[0]
    ncp = _round_up(max(num_classes, 128), 128)
    fc_w = jnp.pad(params['fc_w'].T,
                   ((0, 0), (0, ncp - num_classes))).astype(jnp.bfloat16)
    fc_b = jnp.pad(params['fc_b'],
                   (0, ncp - num_classes)).astype(jnp.float32)

    packed = {
        'conv1': pack_stem(params['conv1']),
        'bn1': params['bn1'],
        'fc_w': fc_w,
        'fc_b': fc_b,
        'num_classes': num_classes,
        'layers': [],
    }
    for layer in params['layers']:
        out_layer = []
        for p in layer:
            q = {
                'conv1': pack1x1(p['conv1']),
                'bn1': p['bn1'],
                'conv2': pack3x3(p['conv2']),
                'bn2': p['bn2'],
                'conv3': pack1x1(p['conv3']),
                'bn3': p['bn3'],
                'stride': p['stride'],
            }
            if 'down_conv' in p:
                q['down_conv'] = pack1x1(p['down_conv'])
                q['down_bn'] = p['down_bn']
            out_layer.append(q)
        packed['layers'].append(out_layer)
    return packed


# --------------------------------------------------------------------------
if __name__ == "__main__":
    key = jax.random.PRNGKey(0)
    key, kx, kp = jax.random.split(key, 3)

    # Small, ResNet-compatible input: batch=2, 3 channels, 64x64 spatial (NCHW).
    x = jax.random.normal(kx, (2, 3, 64, 64), jnp.float32)

    # ResNet(input_dimension=3, num_classes=10): stock resnet50 stem, small head.
    params = init_resnet50_params(kp, input_dim=3, num_classes=10)
    packed = pack_params(params)          # bf16 weight packing done ONCE

    logits = resnet_forward(packed, x)
    logits = jax.block_until_ready(logits)
    assert logits.shape == (2, 10), logits.shape
    assert bool(jnp.all(jnp.isfinite(logits)))
    print("KERNEL_OK")
</pallas_src>

<mosaic_0001>
module attributes {stable_mosaic.version = 11 : i64} {
  func.func @_mm_stats_kernel(%arg0: i32, %arg1: i32, %arg2: memref<512x160xbf16, #tpu.memory_space<vmem>>, %arg3: memref<160x64xbf16, #tpu.memory_space<vmem>>, %arg4: memref<512x64xbf16, #tpu.memory_space<vmem>>, %arg5: memref<1x1x64xf32, #tpu.memory_space<vmem>>, %arg6: memref<1x1x64xf32, #tpu.memory_space<vmem>>) attributes {dimension_semantics = [#tpu.dimension_semantics<parallel>, #tpu.dimension_semantics<parallel>], iteration_bounds = array<i64: 4, 1>, scalar_prefetch = 0 : i64, scratch_operands = 0 : i64, tpu.core_type = #tpu.core_type<tc>, window_params = [{transform_indices = @transform_0, window_bounds = array<i64: 512, 160>}, {transform_indices = @transform_1, window_bounds = array<i64: 160, 64>}, {transform_indices = @transform_2, window_bounds = array<i64: 512, 64>}, {transform_indices = @transform_3, window_bounds = array<i64: 1, 1, 64>}, {transform_indices = @transform_4, window_bounds = array<i64: 1, 1, 64>}]} {
    %c0 = arith.constant 0 : index
    %c0_0 = arith.constant 0 : index
    %0 = vector.load %arg2[%c0, %c0_0] : memref<512x160xbf16, #tpu.memory_space<vmem>>, vector<512x160xbf16>
    %c0_1 = arith.constant 0 : index
    %c0_2 = arith.constant 0 : index
    %1 = vector.load %arg3[%c0_1, %c0_2] : memref<160x64xbf16, #tpu.memory_space<vmem>>, vector<160x64xbf16>
    %cst = arith.constant dense<0.000000e+00> : vector<512x64xf32>
    %2 = tpu.matmul %0, %1, %cst {dimension_numbers = #tpu.dot_dimension_numbers<[1], [0], [0], [1], [0, 0, 1, 1], [], []>} : vector<512x160xbf16>, vector<160x64xbf16>, vector<512x64xf32> -> vector<512x64xf32>
    %3 = arith.truncf %2 : vector<512x64xf32> to vector<512x64xbf16>
    %c0_3 = arith.constant 0 : index
    %c0_4 = arith.constant 0 : index
    %4 = vector.load %arg4[%c0_3, %c0_4] : memref<512x64xbf16, #tpu.memory_space<vmem>>, vector<512x64xbf16>
    tpu.vector_store %arg4[%c0_3, %c0_4], %3 {strides = array<i32>} : memref<512x64xbf16, #tpu.memory_space<vmem>>, vector<512x64xbf16>,
    %cst_5 = arith.constant dense<0.000000e+00> : vector<64xf32>
    %5 = vector.multi_reduction <add>, %2, %cst_5 [0] : vector<512x64xf32> to vector<64xf32>
    %6 = vector.shape_cast %5 : vector<64xf32> to vector<1x64xf32>
    %7 = vector.shape_cast %6 : vector<1x64xf32> to vector<1x1x64xf32>
    %c0_6 = arith.constant 0 : index
    %c0_7 = arith.constant 0 : index
    %c0_8 = arith.constant 0 : index
    %8 = vector.load %arg5[%c0_6, %c0_7, %c0_8] : memref<1x1x64xf32, #tpu.memory_space<vmem>>, vector<1x1x64xf32>
    tpu.vector_store %arg5[%c0_6, %c0_7, %c0_8], %7 {strides = array<i32>} : memref<1x1x64xf32, #tpu.memory_space<vmem>>, vector<1x1x64xf32>,
    %9 = arith.mulf %2, %2 : vector<512x64xf32>
    %cst_9 = arith.constant dense<0.000000e+00> : vector<64xf32>
    %10 = vector.multi_reduction <add>, %9, %cst_9 [0] : vector<512x64xf32> to vector<64xf32>
    %11 = vector.shape_cast %10 : vector<64xf32> to vector<1x64xf32>
    %12 = vector.shape_cast %11 : vector<1x64xf32> to vector<1x1x64xf32>
    %c0_10 = arith.constant 0 : index
    %c0_11 = arith.constant 0 : index
    %c0_12 = arith.constant 0 : index
    %13 = vector.load %arg6[%c0_10, %c0_11, %c0_12] : memref<1x1x64xf32, #tpu.memory_space<vmem>>, vector<1x1x64xf32>
    tpu.vector_store %arg6[%c0_10, %c0_11, %c0_12], %12 {strides = array<i32>} : memref<1x1x64xf32, #tpu.memory_space<vmem>>, vector<1x1x64xf32>,
    return
  }
  func.func @transform_0(%arg0: i32, %arg1: i32) -> (i32, i32) {
    %c0_i32 = arith.constant 0 : i32
    %c0_i32_0 = arith.constant 0 : i32
    return %arg0, %c0_i32 : i32, i32
  }
  func.func @transform_1(%arg0: i32, %arg1: i32) -> (i32, i32) {
    %c0_i32 = arith.constant 0 : i32
    %c0_i32_0 = arith.constant 0 : i32
    return %c0_i32, %arg1 : i32, i32
  }
  func.func @transform_2(%arg0: i32, %arg1: i32) -> (i32, i32) {
    %c0_i32 = arith.constant 0 : i32
    return %arg0, %arg1 : i32, i32
  }
  func.func @transform_3(%arg0: i32, %arg1: i32) -> (i32, i32, i32) {
    %c0_i32 = arith.constant 0 : i32
    %c0_i32_0 = arith.constant 0 : i32
    return %arg0, %c0_i32, %arg1 : i32, i32, i32
  }
  func.func @transform_4(%arg0: i32, %arg1: i32) -> (i32, i32, i32) {
    %c0_i32 = arith.constant 0 : i32
    %c0_i32_0 = arith.constant 0 : i32
    return %arg0, %c0_i32, %arg1 : i32, i32, i32
  }
}

</mosaic_0001>

<llo_original>
// kernel: tpu_custom_call.1
$region0: #{tpu_custom_call.1}
  #allocation0 [shape = 'u32[]', space=smem, size = 0x4, offset = 0x4, fixed_abs, tag = 'smem constant byte address 0x4 - core index']
  #allocation1 [shape = 'u32[144,128]{1,0:T(1,128)}', space=vmem, size = 0x12000, scoped, tag = 'internal scratch']
  %s0 = inlined_call_operand.vmem [shape: bf16[2048,160], index: 0, kind: input, shape index: {}]
  %s1 = inlined_call_operand.vmem [shape: bf16[160,64], index: 1, kind: input, shape index: {}]
  %s2 = inlined_call_operand.vmem [shape: bf16[2048,64], index: 2, kind: output, shape index: {0}]
  %s3 = inlined_call_operand.hbm [shape: f32[4,1,64], index: 3, kind: output, shape index: {1}]
  %s4 = inlined_call_operand.hbm [shape: f32[4,1,64], index: 4, kind: output, shape index: {2}]
  %5 = xla_tuple %s2, %s3, %s4
  %s6 = sld [smem:[#allocation0]]
  $region57: #{tpu_custom_call.1} parent=0
    _
  %s8 = ssub.s32 1, %s6
  %s9 = scalar_select 0, %s8, %s6
  $region1: #{tpu_custom_call.1} parent=0
    #allocation2 [shape = 'u8[1024]{0}', space=vmem, size = 0x400, scoped, tag = 'output window, operand 1']
    #allocation3 [shape = 's32[2]{0}', space=sflag, size = 0x8, scoped, tag = 'scoped memory for tpu_custom_call.1']
    #allocation4 [shape = 'u8[1024]{0}', space=vmem, size = 0x400, scoped, tag = 'output window, operand 2']
    #allocation5 [shape = 's32[2]{0}', space=sflag, size = 0x8, scoped, tag = 'scoped memory for tpu_custom_call.1']
    %10 = vsyncpa [#allocation3], 0
    %s11 = scalar_lea.sflag [#allocation3], 1
    %12 = vsyncpa %s11, 0
    %13 = vsyncpa [#allocation5], 0
    %s14 = scalar_lea.sflag [#allocation5], 1
    %15 = vsyncpa %s14, 0
    loop: start=0, step=1, limit=6
    $region2: #{tpu_custom_call.1} parent=1 // loop_pre_header
      _
    $region3: #{tpu_custom_call.1} parent=1 // loop_header
      %s17 = sphi 0, %s21
      %p18 = scmp.ge.s32.totalorder %s17, 6
      %s24 = sphi 0, %s36
      %s25 = sphi 0, %s32
      %s26 = sphi 0, %s24
      %s27 = sphi 0, %s25
      %s28 = sphi 0, %s26
      %s29 = sphi 0, %s27
      %s39 = sphi 0, %s41
      %s42 = sphi 0, %s39
      %s43 = sphi 0, %s42
      %s59 = sphi 0, %s43
      %s65 = sphi 0, %s67
      %s68 = sphi 0, %s65
      %s69 = sphi 0, %s68
      %s85 = sphi 0, %s69
      %s93 = sphi 0, %s95
      %s96 = sphi 0, %s93
      %s97 = sphi 0, %s96
      %s113 = sphi 0, %s97
      %s121 = sphi 0, %s123
      %s124 = sphi 0, %s121
      %s125 = sphi 0, %s124
      %s141 = sphi 0, %s125
      %s149 = sphi 0, %s151
      %s152 = sphi 0, %s149
      %s153 = sphi 0, %s152
      %s169 = sphi 0, %s153
    $region4: #{tpu_custom_call.1} parent=1 // loop_header_branch
      %20 = sbr.rel (%p18) target = $region8
    $region5: #{tpu_custom_call.1} parent=1 // loop_body
      %s22 = ssub.s32 %s17, 1
      %s23 = ssub.s32 %s17, 2
      %s30 = sadd.s32 1, %s25
      %p31 = scmp.ge.s32.totalorder %s30, 1
      %s32 = scalar_select %p31, 0, %s30
      %s33 = sadd.s32 1, %s24
      %s34 = scalar_select %p31, %s33, %s24
      %p35 = scmp.ge.s32.totalorder %s34, 4
      %s36 = scalar_select %p35, 0, %s34
      %s37 = ssub.s32 %s24, %s36
      %p38 = scmp.eq.s32.totalorder %s37, 0
      %s40 = sadd.s32 %s39, 1
      %s41 = scalar_select %p38, %s39, %s40
      %p44 = pneg %p38
      %p45 = scmp.eq.s32.totalorder %s17, 3
      %p46 = por %p44, %p45
      %p47 = scmp.ne.s32.totalorder %s39, %s42
      %p48 = scmp.eq.s32.totalorder %s17, 0
      %p49 = por %p47, %p48
      %p50 = scmp.ne.s32.totalorder %s39, %s42
      %p51 = scmp.eq.s32.totalorder %s22, 3
      %p52 = por %p50, %p51
      %p53 = scmp.ne.s32.totalorder %s42, %s43
      %p54 = scmp.eq.s32.totalorder %s22, 0
      %p55 = por %p53, %p54
      %p56 = scmp.ne.s32.totalorder %s42, %s43
      %p57 = scmp.eq.s32.totalorder %s23, 3
      %p58 = por %p56, %p57
      %p60 = scmp.ne.s32.totalorder %s43, %s59
      %p61 = scmp.eq.s32.totalorder %s23, 0
      %p62 = por %p60, %p61
      %s63 = ssub.s32 %s25, %s32
      %p64 = scmp.eq.s32.totalorder %s63, 0
      %s66 = sadd.s32 %s65, 1
      %s67 = scalar_select %p64, %s65, %s66
      %p70 = pneg %p64
      %p71 = scmp.eq.s32.totalorder %s17, 3
      %p72 = por %p70, %p71
      %p73 = scmp.ne.s32.totalorder %s65, %s68
      %p74 = scmp.eq.s32.totalorder %s17, 0
      %p75 = por %p73, %p74
      %p76 = scmp.ne.s32.totalorder %s65, %s68
      %p77 = scmp.eq.s32.totalorder %s22, 3
      %p78 = por %p76, %p77
      %p79 = scmp.ne.s32.totalorder %s68, %s69
      %p80 = scmp.eq.s32.totalorder %s22, 0
      %p81 = por %p79, %p80
      %p82 = scmp.ne.s32.totalorder %s68, %s69
      %p83 = scmp.eq.s32.totalorder %s23, 3
      %p84 = por %p82, %p83
      %p86 = scmp.ne.s32.totalorder %s69, %s85
      %p87 = scmp.eq.s32.totalorder %s23, 0
      %p88 = por %p86, %p87
      %s89 = ssub.s32 %s24, %s36
      %s90 = ssub.s32 %s25, %s32
      %s91 = sor.u32 %s89, %s90
      %p92 = scmp.eq.s32.totalorder %s91, 0
      %s94 = sadd.s32 %s93, 1
      %s95 = scalar_select %p92, %s93, %s94
      %p98 = pneg %p92
      %p99 = scmp.eq.s32.totalorder %s17, 3
      %p100 = por %p98, %p99
      %p101 = scmp.ne.s32.totalorder %s93, %s96
      %p102 = scmp.eq.s32.totalorder %s17, 0
      %p103 = por %p101, %p102
      %p104 = scmp.ne.s32.totalorder %s93, %s96
      %p105 = scmp.eq.s32.totalorder %s22, 3
      %p106 = por %p104, %p105
      %p107 = scmp.ne.s32.totalorder %s96, %s97
      %p108 = scmp.eq.s32.totalorder %s22, 0
      %p109 = por %p107, %p108
      %p110 = scmp.ne.s32.totalorder %s96, %s97
      %p111 = scmp.eq.s32.totalorder %s23, 3
      %p112 = por %p110, %p111
      %p114 = scmp.ne.s32.totalorder %s97, %s113
      %p115 = scmp.eq.s32.totalorder %s23, 0
      %p116 = por %p114, %p115
      %s117 = ssub.s32 %s24, %s36
      %s118 = ssub.s32 %s25, %s32
      %s119 = sor.u32 %s117, %s118
      %p120 = scmp.eq.s32.totalorder %s119, 0
      %s122 = sadd.s32 %s121, 1
      %s123 = scalar_select %p120, %s121, %s122
      %p126 = pneg %p120
      %p127 = scmp.eq.s32.totalorder %s17, 3
      %p128 = por %p126, %p127
      %p129 = scmp.ne.s32.totalorder %s121, %s124
      %p130 = scmp.eq.s32.totalorder %s17, 0
      %p131 = por %p129, %p130
      %p132 = scmp.ne.s32.totalorder %s121, %s124
      %p133 = scmp.eq.s32.totalorder %s22, 3
      %p134 = por %p132, %p133
      %p135 = scmp.ne.s32.totalorder %s124, %s125
      %p136 = scmp.eq.s32.totalorder %s22, 0
      %p137 = por %p135, %p136
      %p138 = scmp.ne.s32.totalorder %s124, %s125
      %p139 = scmp.eq.s32.totalorder %s23, 3
      %p140 = por %p138, %p139
      %p142 = scmp.ne.s32.totalorder %s125, %s141
      %p143 = scmp.eq.s32.totalorder %s23, 0
      %p144 = por %p142, %p143
      %s145 = ssub.s32 %s24, %s36
      %s146 = ssub.s32 %s25, %s32
      %s147 = sor.u32 %s145, %s146
      %p148 = scmp.eq.s32.totalorder %s147, 0
      %s150 = sadd.s32 %s149, 1
      %s151 = scalar_select %p148, %s149, %s150
      %p154 = pneg %p148
      %p155 = scmp.eq.s32.totalorder %s17, 3
      %p156 = por %p154, %p155
      %p157 = scmp.ne.s32.totalorder %s149, %s152
      %p158 = scmp.eq.s32.totalorder %s17, 0
      %p159 = por %p157, %p158
      %p160 = scmp.ne.s32.totalorder %s149, %s152
      %p161 = scmp.eq.s32.totalorder %s22, 3
      %p162 = por %p160, %p161
      %p163 = scmp.ne.s32.totalorder %s152, %s153
      %p164 = scmp.eq.s32.totalorder %s22, 0
      %p165 = por %p163, %p164
      %p166 = scmp.ne.s32.totalorder %s152, %s153
      %p167 = scmp.eq.s32.totalorder %s23, 3
      %p168 = por %p166, %p167
      %p170 = scmp.ne.s32.totalorder %s153, %s169
      %p171 = scmp.eq.s32.totalorder %s23, 0
      %p172 = por %p170, %p171
      %p173 = scmp.le.s32.totalorder 1, %s17
      %p174 = scmp.lt.s32.totalorder %s17, 5
      %p175 = pnand %p173, %p174
      %p176 = pneg %p175
      // Predicated region
      $region9: #{tpu_custom_call.1} parent=5 // pred_check
        _
      $region10: #{tpu_custom_call.1} parent=5 // pred_check_branch
        %178 = sbr.rel (%p175) target = $region12
      $region11: #{tpu_custom_call.1} parent=5 // pred_region
        %s179 = ssub.s32 %s17, 1
        // Predicated region
        $region13: #{tpu_custom_call.1} parent=11 // pred_check
          %p180 = pneg %p81
        $region14: #{tpu_custom_call.1} parent=11 // pred_check_branch
          %182 = sbr.rel (%p180) target = $region16
        $region15: #{tpu_custom_call.1} parent=11 // pred_region
          %p183 = scmp.lt.s32.totalorder %s27, 0
          %s184 = scalar_select %p183, %s27, 0
          %s185 = smul.addr %s184, 4
          %s186 = scalar_lea.vmem %s1, %s185
        $region16: #{tpu_custom_call.1} parent=11 // pred_fallthru
          _
      $region12: #{tpu_custom_call.1} parent=5 // pred_fallthru
        _
      %p187 = scmp.lt.s32.totalorder %s17, 4
      // Predicated region
      $region17: #{tpu_custom_call.1} parent=5 // pred_check
        %p188 = pneg %p187
      $region18: #{tpu_custom_call.1} parent=5 // pred_check_branch
        %190 = sbr.rel (%p188) target = $region20
      $region19: #{tpu_custom_call.1} parent=5 // pred_region
        // Predicated region
        $region21: #{tpu_custom_call.1} parent=19 // pred_check
          %p191 = pneg %p49
        $region22: #{tpu_custom_call.1} parent=19 // pred_check_branch
          %193 = sbr.rel (%p191) target = $region24
        $region23: #{tpu_custom_call.1} parent=19 // pred_region
          %s194 = smul.u32 64, %s24
          %p195 = scmp.lt.s32.totalorder %s194, 255
          %s196 = scalar_select %p195, %s194, 255
          %s197 = smul.addr %s196, 2
          %s198 = smul.addr %s197, 4
          %s199 = scalar_lea.vmem %s0, %s198
          %s200 = smul.u32 64, %s24
        $region24: #{tpu_custom_call.1} parent=19 // pred_fallthru
          _
      $region20: #{tpu_custom_call.1} parent=5 // pred_fallthru
        _
      %p201 = scmp.le.s32.totalorder 1, %s17
      %p202 = scmp.lt.s32.totalorder %s17, 5
      %p203 = pnand %p201, %p202
      %p204 = pneg %p203
      // Predicated region
      $region25: #{tpu_custom_call.1} parent=5 // pred_check
        _
      $region26: #{tpu_custom_call.1} parent=5 // pred_check_branch
        %206 = sbr.rel (%p203) target = $region28
      $region27: #{tpu_custom_call.1} parent=5 // pred_region
        %s207 = ssub.s32 %s17, 1
        %s208 = smul.u32 64, %s26
        %p209 = scmp.lt.s32.totalorder %s208, 255
        %s210 = scalar_select %p209, %s208, 255
        %s211 = smul.addr %s210, 2
        %s212 = smul.addr %s211, 4
        %s213 = scalar_lea.vmem %s0, %s212
        %p214 = pneg %p55
        %p215 = pneg %p52
        %p216 = scmp.lt.s32.totalorder %s27, 0
        %s217 = scalar_select %p216, %s27, 0
        %s218 = smul.addr %s217, 4
        %s219 = scalar_lea.vmem %s1, %s218
        %p220 = pneg %p81
        %p221 = pneg %p78
        %p222 = pneg %p109
        %p223 = pneg %p106
        %s224 = smul.u32 64, %s26
        %p225 = scmp.lt.s32.totalorder %s224, 255
        %s226 = scalar_select %p225, %s224, 255
        %p227 = scmp.lt.s32.totalorder %s27, 0
        %s228 = scalar_select %p227, %s27, 0
        %s229 = sadd.s32 %s228, %s226
        %s230 = smul.addr %s229, 4
        %s231 = scalar_lea.vmem %s2, %s230
        %p232 = pneg %p137
        %p233 = pneg %p134
        %s234 = sand.u32 %s124, 1
        %s235 = scalar_lea.sflag [#allocation3], %s234
        %s236 = sand.u32 %s124, 1
        %s237 = scalar_lea.vmem [#allocation2], %s236
        %p238 = pneg %p165
        %p239 = pneg %p162
        %s240 = sand.u32 %s152, 1
        %s241 = scalar_lea.sflag [#allocation5], %s240
        %s242 = sand.u32 %s152, 1
        %s243 = scalar_lea.vmem [#allocation4], %s242
        %s244 = smul.u32 64, %s26
        %p245 = scmp.lt.s32.totalorder %s244, 255
        %s246 = scalar_select %p245, %s244, 255
        %s247 = smul.addr %s246, 2
        %s248 = smul.addr %s247, 4
        %s249 = scalar_lea.vmem %s0, %s248
        %s250 = smul.u32 64, %s26
        %p251 = scmp.lt.s32.totalorder %s27, 0
        %s252 = scalar_select %p251, %s27, 0
        %s253 = smul.addr %s252, 4
        %s254 = scalar_lea.vmem %s1, %s253
        %s255 = smul.u32 64, %s26
        %p256 = scmp.lt.s32.totalorder %s255, 255
        %s257 = scalar_select %p256, %s255, 255
        %p258 = scmp.lt.s32.totalorder %s27, 0
        %s259 = scalar_select %p258, %s27, 0
        %s260 = sadd.s32 %s259, %s257
        %s261 = smul.addr %s260, 4
        %s262 = scalar_lea.vmem %s2, %s261
        %s263 = smul.u32 64, %s26
        %v265 = vld [vmem:[%s249] sm:$0xff]
        %v266 = vld [vmem:[%s249 + $0x8] sm:$0xff]
        %v267 = vld [vmem:[%s249 + $0x10] sm:$0xff]
        %v268 = vld [vmem:[%s249 + $0x18] sm:$0xff]
        %v269 = vld [vmem:[%s249 + $0x20] sm:$0xff]
        %v270 = vld [vmem:[%s249 + $0x28] sm:$0xff]
        %v271 = vld [vmem:[%s249 + $0x30] sm:$0xff]
        %v272 = vld [vmem:[%s249 + $0x38] sm:$0xff]
        %v273 = vld [vmem:[%s249 + $0x40] sm:$0xff]
        %v274 = vld [vmem:[%s249 + $0x48] sm:$0xff]
        %v275 = vld [vmem:[%s249 + $0x50] sm:$0xff]
        %v276 = vld [vmem:[%s249 + $0x58] sm:$0xff]
        %v277 = vld [vmem:[%s249 + $0x60] sm:$0xff]
        %v278 = vld [vmem:[%s249 + $0x68] sm:$0xff]
        %v279 = vld [vmem:[%s249 + $0x70] sm:$0xff]
        %v280 = vld [vmem:[%s249 + $0x78] sm:$0xff]
        %v281 = vld [vmem:[%s249 + $0x80] sm:$0xff]
        %v282 = vld [vmem:[%s249 + $0x88] sm:$0xff]
        %v283 = vld [vmem:[%s249 + $0x90] sm:$0xff]
        %v284 = vld [vmem:[%s249 + $0x98] sm:$0xff]
        %v285 = vld [vmem:[%s249 + $0xa0] sm:$0xff]
        %v286 = vld [vmem:[%s249 + $0xa8] sm:$0xff]
        %v287 = vld [vmem:[%s249 + $0xb0] sm:$0xff]
        %v288 = vld [vmem:[%s249 + $0xb8] sm:$0xff]
        %v289 = vld [vmem:[%s249 + $0xc0] sm:$0xff]
        %v290 = vld [vmem:[%s249 + $0xc8] sm:$0xff]
        %v291 = vld [vmem:[%s249 + $0xd0] sm:$0xff]
        %v292 = vld [vmem:[%s249 + $0xd8] sm:$0xff]
        %v293 = vld [vmem:[%s249 + $0xe0] sm:$0xff]
        %v294 = vld [vmem:[%s249 + $0xe8] sm:$0xff]
        %v295 = vld [vmem:[%s249 + $0xf0] sm:$0xff]
        %v296 = vld [vmem:[%s249 + $0xf8] sm:$0xff]
        %v297 = vld [vmem:[%s249 + $0x100] sm:$0xff]
        %v298 = vld [vmem:[%s249 + $0x108] sm:$0xff]
        %v299 = vld [vmem:[%s249 + $0x110] sm:$0xff]
        %v300 = vld [vmem:[%s249 + $0x118] sm:$0xff]
        %v301 = vld [vmem:[%s249 + $0x120] sm:$0xff]
        %v302 = vld [vmem:[%s249 + $0x128] sm:$0xff]
        %v303 = vld [vmem:[%s249 + $0x130] sm:$0xff]
        %v304 = vld [vmem:[%s249 + $0x138] sm:$0xff]
        %v305 = vld [vmem:[%s249 + $0x140] sm:$0xff]
        %v306 = vld [vmem:[%s249 + $0x148] sm:$0xff]
        %v307 = vld [vmem:[%s249 + $0x150] sm:$0xff]
        %v308 = vld [vmem:[%s249 + $0x158] sm:$0xff]
        %v309 = vld [vmem:[%s249 + $0x160] sm:$0xff]
        %v310 = vld [vmem:[%s249 + $0x168] sm:$0xff]
        %v311 = vld [vmem:[%s249 + $0x170] sm:$0xff]
        %v312 = vld [vmem:[%s249 + $0x178] sm:$0xff]
        %v313 = vld [vmem:[%s249 + $0x180] sm:$0xff]
        %v314 = vld [vmem:[%s249 + $0x188] sm:$0xff]
        %v315 = vld [vmem:[%s249 + $0x190] sm:$0xff]
        %v316 = vld [vmem:[%s249 + $0x198] sm:$0xff]
        %v317 = vld [vmem:[%s249 + $0x1a0] sm:$0xff]
        %v318 = vld [vmem:[%s249 + $0x1a8] sm:$0xff]
        %v319 = vld [vmem:[%s249 + $0x1b0] sm:$0xff]
        %v320 = vld [vmem:[%s249 + $0x1b8] sm:$0xff]
        %v321 = vld [vmem:[%s249 + $0x1c0] sm:$0xff]
        %v322 = vld [vmem:[%s249 + $0x1c8] sm:$0xff]
        %v323 = vld [vmem:[%s249 + $0x1d0] sm:$0xff]
        %v324 = vld [vmem:[%s249 + $0x1d8] sm:$0xff]
        %v325 = vld [vmem:[%s249 + $0x1e0] sm:$0xff]
        %v326 = vld [vmem:[%s249 + $0x1e8] sm:$0xff]
        %v327 = vld [vmem:[%s249 + $0x1f0] sm:$0xff]
        %v328 = vld [vmem:[%s249 + $0x1f8] sm:$0xff]
        %v329 = vld [vmem:[%s254] sm:$0xf]
        %v330 = vld [vmem:[%s254 + $0x4] sm:$0xf]
        %v331 = vld [vmem:[%s254 + $0x8] sm:$0xf]
        %v332 = vld [vmem:[%s254 + $0xc] sm:$0xf]
        %v333 = vld [vmem:[%s254 + $0x10] sm:$0xf]
        %v334 = vld [vmem:[%s254 + $0x14] sm:$0xf]
        %v335 = vld [vmem:[%s254 + $0x18] sm:$0xf]
        %v336 = vld [vmem:[%s254 + $0x1c] sm:$0xf]
        %v337 = vld [vmem:[%s254 + $0x20] sm:$0xf]
        %v338 = vld [vmem:[%s254 + $0x24] sm:$0xf]
        %v339 = vld [vmem:[%s254 + $0x28] sm:$0xf]
        %v340 = vld [vmem:[%s254 + $0x2c] sm:$0xf]
        %v341 = vld [vmem:[%s254 + $0x30] sm:$0xf]
        %v342 = vld [vmem:[%s254 + $0x34] sm:$0xf]
        %v343 = vld [vmem:[%s254 + $0x38] sm:$0xf]
        %v344 = vld [vmem:[%s254 + $0x3c] sm:$0xf]
        %v345 = vld [vmem:[%s254 + $0x40] sm:$0xf]
        %v346 = vld [vmem:[%s254 + $0x44] sm:$0xf]
        %v347 = vld [vmem:[%s254 + $0x48] sm:$0xf]
        %v348 = vld [vmem:[%s254 + $0x4c] sm:$0xf]
        %v413 = vunpack.c.l.b16 %v265
        %v414 = vunpack.c.h.b16 %v265
        %v415 = vunpack.c.l.b16 %v266
        %v416 = vunpack.c.h.b16 %v266
        %v417 = vunpack.c.l.b16 %v267
        %v418 = vunpack.c.h.b16 %v267
        %v419 = vunpack.c.l.b16 %v268
        %v420 = vunpack.c.h.b16 %v268
        %v421 = vunpack.c.l.b16 %v269
        %v422 = vunpack.c.h.b16 %v269
        %v423 = vunpack.c.l.b16 %v270
        %v424 = vunpack.c.h.b16 %v270
        %v425 = vunpack.c.l.b16 %v271
        %v426 = vunpack.c.h.b16 %v271
        %v427 = vunpack.c.l.b16 %v272
        %v428 = vunpack.c.h.b16 %v272
        %v429 = vunpack.c.l.b16 %v273
        %v430 = vunpack.c.h.b16 %v273
        %v431 = vunpack.c.l.b16 %v274
        %v432 = vunpack.c.h.b16 %v274
        %v433 = vunpack.c.l.b16 %v275
        %v434 = vunpack.c.h.b16 %v275
        %v435 = vunpack.c.l.b16 %v276
        %v436 = vunpack.c.h.b16 %v276
        %v437 = vunpack.c.l.b16 %v277
        %v438 = vunpack.c.h.b16 %v277
        %v439 = vunpack.c.l.b16 %v278
        %v440 = vunpack.c.h.b16 %v278
        %v441 = vunpack.c.l.b16 %v279
        %v442 = vunpack.c.h.b16 %v279
        %v443 = vunpack.c.l.b16 %v280
        %v444 = vunpack.c.h.b16 %v280
        %v445 = vunpack.c.l.b16 %v281
        %v446 = vunpack.c.h.b16 %v281
        %v447 = vunpack.c.l.b16 %v282
        %v448 = vunpack.c.h.b16 %v282
        %v449 = vunpack.c.l.b16 %v283
        %v450 = vunpack.c.h.b16 %v283
        %v451 = vunpack.c.l.b16 %v284
        %v452 = vunpack.c.h.b16 %v284
        %v453 = vunpack.c.l.b16 %v285
        %v454 = vunpack.c.h.b16 %v285
        %v455 = vunpack.c.l.b16 %v286
        %v456 = vunpack.c.h.b16 %v286
        %v457 = vunpack.c.l.b16 %v287
        %v458 = vunpack.c.h.b16 %v287
        %v459 = vunpack.c.l.b16 %v288
        %v460 = vunpack.c.h.b16 %v288
        %v461 = vunpack.c.l.b16 %v289
        %v462 = vunpack.c.h.b16 %v289
        %v463 = vunpack.c.l.b16 %v290
        %v464 = vunpack.c.h.b16 %v290
        %v465 = vunpack.c.l.b16 %v291
        %v466 = vunpack.c.h.b16 %v291
        %v467 = vunpack.c.l.b16 %v292
        %v468 = vunpack.c.h.b16 %v292
        %v469 = vunpack.c.l.b16 %v293
        %v470 = vunpack.c.h.b16 %v293
        %v471 = vunpack.c.l.b16 %v294
        %v472 = vunpack.c.h.b16 %v294
        %v473 = vunpack.c.l.b16 %v295
        %v474 = vunpack.c.h.b16 %v295
        %v475 = vunpack.c.l.b16 %v296
        %v476 = vunpack.c.h.b16 %v296
        %v477 = vunpack.c.l.b16 %v297
        %v478 = vunpack.c.h.b16 %v297
        %v479 = vunpack.c.l.b16 %v298
        %v480 = vunpack.c.h.b16 %v298
        %v481 = vunpack.c.l.b16 %v299
        %v482 = vunpack.c.h.b16 %v299
        %v483 = vunpack.c.l.b16 %v300
        %v484 = vunpack.c.h.b16 %v300
        %v485 = vunpack.c.l.b16 %v301
        %v486 = vunpack.c.h.b16 %v301
        %v487 = vunpack.c.l.b16 %v302
        %v488 = vunpack.c.h.b16 %v302
        %v489 = vunpack.c.l.b16 %v303
        %v490 = vunpack.c.h.b16 %v303
        %v491 = vunpack.c.l.b16 %v304
        %v492 = vunpack.c.h.b16 %v304
        %v493 = vunpack.c.l.b16 %v305
        %v494 = vunpack.c.h.b16 %v305
        %v495 = vunpack.c.l.b16 %v306
        %v496 = vunpack.c.h.b16 %v306
        %v497 = vunpack.c.l.b16 %v307
        %v498 = vunpack.c.h.b16 %v307
        %v499 = vunpack.c.l.b16 %v308
        %v500 = vunpack.c.h.b16 %v308
        %v501 = vunpack.c.l.b16 %v309
        %v502 = vunpack.c.h.b16 %v309
        %v503 = vunpack.c.l.b16 %v310
        %v504 = vunpack.c.h.b16 %v310
        %v505 = vunpack.c.l.b16 %v311
        %v506 = vunpack.c.h.b16 %v311
        %v507 = vunpack.c.l.b16 %v312
        %v508 = vunpack.c.h.b16 %v312
        %v509 = vunpack.c.l.b16 %v313
        %v510 = vunpack.c.h.b16 %v313
        %v511 = vunpack.c.l.b16 %v314
        %v512 = vunpack.c.h.b16 %v314
        %v513 = vunpack.c.l.b16 %v315
        %v514 = vunpack.c.h.b16 %v315
        %v515 = vunpack.c.l.b16 %v316
        %v516 = vunpack.c.h.b16 %v316
        %v517 = vunpack.c.l.b16 %v317
        %v518 = vunpack.c.h.b16 %v317
        %v519 = vunpack.c.l.b16 %v318
        %v520 = vunpack.c.h.b16 %v318
        %v521 = vunpack.c.l.b16 %v319
        %v522 = vunpack.c.h.b16 %v319
        %v523 = vunpack.c.l.b16 %v320
        %v524 = vunpack.c.h.b16 %v320
        %v525 = vunpack.c.l.b16 %v321
        %v526 = vunpack.c.h.b16 %v321
        %v527 = vunpack.c.l.b16 %v322
        %v528 = vunpack.c.h.b16 %v322
        %v529 = vunpack.c.l.b16 %v323
        %v530 = vunpack.c.h.b16 %v323
        %v531 = vunpack.c.l.b16 %v324
        %v532 = vunpack.c.h.b16 %v324
        %v533 = vunpack.c.l.b16 %v325
        %v534 = vunpack.c.h.b16 %v325
        %v535 = vunpack.c.l.b16 %v326
        %v536 = vunpack.c.h.b16 %v326
        %v537 = vunpack.c.l.b16 %v327
        %v538 = vunpack.c.h.b16 %v327
        %v539 = vunpack.c.l.b16 %v328
        %v540 = vunpack.c.h.b16 %v328
        %v541 = vpack.c.b16 %v415, %v413
        %v542 = vpack.c.b16 %v416, %v414
        %v543 = vpack.c.b16 %v419, %v417
        %v544 = vpack.c.b16 %v420, %v418
        %v545 = vpack.c.b16 %v423, %v421
        %v546 = vpack.c.b16 %v424, %v422
        %v547 = vpack.c.b16 %v427, %v425
        %v548 = vpack.c.b16 %v428, %v426
        %v549 = vpack.c.b16 %v431, %v429
        %v550 = vpack.c.b16 %v432, %v430
        %v551 = vpack.c.b16 %v435, %v433
        %v552 = vpack.c.b16 %v436, %v434
        %v553 = vpack.c.b16 %v439, %v437
        %v554 = vpack.c.b16 %v440, %v438
        %v555 = vpack.c.b16 %v443, %v441
        %v556 = vpack.c.b16 %v444, %v442
        %v557 = vpack.c.b16 %v447, %v445
        %v558 = vpack.c.b16 %v448, %v446
        %v559 = vpack.c.b16 %v451, %v449
        %v560 = vpack.c.b16 %v452, %v450
        %v561 = vpack.c.b16 %v455, %v453
        %v562 = vpack.c.b16 %v456, %v454
        %v563 = vpack.c.b16 %v459, %v457
        %v564 = vpack.c.b16 %v460, %v458
        %v565 = vpack.c.b16 %v463, %v461
        %v566 = vpack.c.b16 %v464, %v462
        %v567 = vpack.c.b16 %v467, %v465
        %v568 = vpack.c.b16 %v468, %v466
        %v569 = vpack.c.b16 %v471, %v469
        %v570 = vpack.c.b16 %v472, %v470
        %v571 = vpack.c.b16 %v475, %v473
        %v572 = vpack.c.b16 %v476, %v474
        %v573 = vpack.c.b16 %v479, %v477
        %v574 = vpack.c.b16 %v480, %v478
        %v575 = vpack.c.b16 %v483, %v481
        %v576 = vpack.c.b16 %v484, %v482
        %v577 = vpack.c.b16 %v487, %v485
        %v578 = vpack.c.b16 %v488, %v486
        %v579 = vpack.c.b16 %v491, %v489
        %v580 = vpack.c.b16 %v492, %v490
        %v581 = vpack.c.b16 %v495, %v493
        %v582 = vpack.c.b16 %v496, %v494
        %v583 = vpack.c.b16 %v499, %v497
        %v584 = vpack.c.b16 %v500, %v498
        %v585 = vpack.c.b16 %v503, %v501
        %v586 = vpack.c.b16 %v504, %v502
        %v587 = vpack.c.b16 %v507, %v505
        %v588 = vpack.c.b16 %v508, %v506
        %v589 = vpack.c.b16 %v511, %v509
        %v590 = vpack.c.b16 %v512, %v510
        %v591 = vpack.c.b16 %v515, %v513
        %v592 = vpack.c.b16 %v516, %v514
        %v593 = vpack.c.b16 %v519, %v517
        %v594 = vpack.c.b16 %v520, %v518
        %v595 = vpack.c.b16 %v523, %v521
        %v596 = vpack.c.b16 %v524, %v522
        %v597 = vpack.c.b16 %v527, %v525
        %v598 = vpack.c.b16 %v528, %v526
        %v599 = vpack.c.b16 %v531, %v529
        %v600 = vpack.c.b16 %v532, %v530
        %v601 = vpack.c.b16 %v535, %v533
        %v602 = vpack.c.b16 %v536, %v534
        %v603 = vpack.c.b16 %v539, %v537
        %v604 = vpack.c.b16 %v540, %v538
        %v657 = vunpack.c.l.b16 %v329
        %v658 = vunpack.c.l.b16 %v330
        %v659 = vunpack.c.l.b16 %v331
        %v660 = vunpack.c.l.b16 %v332
        %v661 = vunpack.c.l.b16 %v333
        %v662 = vunpack.c.l.b16 %v334
        %v663 = vunpack.c.l.b16 %v335
        %v664 = vunpack.c.l.b16 %v336
        %v665 = vunpack.c.l.b16 %v337
        %v666 = vunpack.c.l.b16 %v338
        %v667 = vunpack.c.l.b16 %v339
        %v668 = vunpack.c.l.b16 %v340
        %v669 = vunpack.c.l.b16 %v341
        %v670 = vunpack.c.l.b16 %v342
        %v671 = vunpack.c.l.b16 %v343
        %v672 = vunpack.c.l.b16 %v344
        %v673 = vunpack.c.l.b16 %v345
        %v674 = vunpack.c.l.b16 %v346
        %v675 = vunpack.c.l.b16 %v347
        %v676 = vunpack.c.l.b16 %v348
        %v677 = vpack.c.b16 %v658, %v657
        %v678 = vpack.c.b16 %v660, %v659
        %v679 = vpack.c.b16 %v662, %v661
        %v680 = vpack.c.b16 %v664, %v663
        %v681 = vpack.c.b16 %v666, %v665
        %v682 = vpack.c.b16 %v668, %v667
        %v683 = vpack.c.b16 %v670, %v669
        %v684 = vpack.c.b16 %v672, %v671
        %v685 = vpack.c.b16 %v674, %v673
        %v686 = vpack.c.b16 %v676, %v675
        %vm697 = vcmask 261120
        %v699 = vsel %vm697, %v542, 0
        %v702 = vsel %vm697, %v544, 0
        %v705 = vsel %vm697, %v546, 0
        %v708 = vsel %vm697, %v548, 0
        %v711 = vsel %vm697, %v550, 0
        %v714 = vsel %vm697, %v552, 0
        %v717 = vsel %vm697, %v554, 0
        %v720 = vsel %vm697, %v556, 0
        %v723 = vsel %vm697, %v558, 0
        %v726 = vsel %vm697, %v560, 0
        %v729 = vsel %vm697, %v562, 0
        %v732 = vsel %vm697, %v564, 0
        %v735 = vsel %vm697, %v566, 0
        %v738 = vsel %vm697, %v568, 0
        %v741 = vsel %vm697, %v570, 0
        %v744 = vsel %vm697, %v572, 0
        %v747 = vsel %vm697, %v574, 0
        %v750 = vsel %vm697, %v576, 0
        %v753 = vsel %vm697, %v578, 0
        %v756 = vsel %vm697, %v580, 0
        %v759 = vsel %vm697, %v582, 0
        %v762 = vsel %vm697, %v584, 0
        %v765 = vsel %vm697, %v586, 0
        %v768 = vsel %vm697, %v588, 0
        %v771 = vsel %vm697, %v590, 0
        %v774 = vsel %vm697, %v592, 0
        %v777 = vsel %vm697, %v594, 0
        %v780 = vsel %vm697, %v596, 0
        %v783 = vsel %vm697, %v598, 0
        %v786 = vsel %vm697, %v600, 0
        %v789 = vsel %vm697, %v602, 0
        %v792 = vsel %vm697, %v604, 0
        %794 = vmatprep.subr.bf16.mxu0 0
        %795 = vmatpush1.bf16.msra.mxu0 %v684
        %796 = vmatprep.subr.bf16.mxu0 0
        %797 = vmatpush1.bf16.msra.mxu0 %v683
        %798 = vmatprep.subr.bf16.mxu0 0
        %799 = vmatpush1.bf16.msra.mxu0 %v682
        %800 = vmatprep.subr.bf16.mxu0 0
        %801 = vmatpush1.bf16.msra.mxu0 %v681
        %802 = vmatprep.subr.bf16.mxu0 0
        %803 = vmatpush1.bf16.msra.mxu0 %v680
        %804 = vmatprep.subr.bf16.mxu0 0
        %805 = vmatpush1.bf16.msra.mxu0 %v679
        %806 = vmatprep.subr.bf16.mxu0 0
        %807 = vmatpush1.bf16.msra.mxu0 %v678
        %808 = vmatprep.subr.bf16.mxu0 0
        %809 = vmatpush1.bf16.msra.mxu0 %v677
        %810 = vmatprep.subr.bf16.mxu0 0
        %811 = vmatpush2.bf16.msra.mxu0 0
        %812 = vmatprep.subr.bf16.mxu0 0
        %813 = vmatpush2.bf16.msra.mxu0 0
        %814 = vmatprep.subr.bf16.mxu0 0
        %815 = vmatpush2.bf16.msra.mxu0 0
        %816 = vmatprep.subr.bf16.mxu0 0
        %817 = vmatpush2.bf16.msra.mxu0 0
        %818 = vmatprep.subr.bf16.mxu0 0
        %819 = vmatpush2.bf16.msra.mxu0 0
        %820 = vmatprep.subr.bf16.mxu0 0
        %821 = vmatpush2.bf16.msra.mxu0 0
        %822 = vmatprep.subr.bf16.mxu0 0
        %823 = vmatpush2.bf16.msra.mxu0 %v686
        %824 = vmatprep.subr.bf16.mxu0 0
        %825 = vmatpush2.bf16.msra.mxu0 %v685
        %826 = vmatprep.mubr.bf16.mxu0 %v699
        %827 = vmatmul.mubr.bf16.gmra.mxu0 %v541
        %v828 = vpop.f32.mrf.mxu0
        %v829 = vadd.f32 0.0, %v828
        %v830 = vpop.f32.mrf.mxu0
        %v831 = vpop.f32.mrf.mxu0
        %v832 = vadd.f32 0.0, %v831
        %v833 = vpop.f32.mrf.mxu0
        %834 = vmatprep.mubr.bf16.mxu0 %v702
        %835 = vmatmul.mubr.bf16.gmra.mxu0 %v543
        %v836 = vpop.f32.mrf.mxu0
        %v837 = vadd.f32 0.0, %v836
        %v838 = vpop.f32.mrf.mxu0
        %v839 = vpop.f32.mrf.mxu0
        %v840 = vadd.f32 0.0, %v839
        %v841 = vpop.f32.mrf.mxu0
        %842 = vmatprep.mubr.bf16.mxu0 %v705
        %843 = vmatmul.mubr.bf16.gmra.mxu0 %v545
        %v844 = vpop.f32.mrf.mxu0
        %v845 = vadd.f32 0.0, %v844
        %v846 = vpop.f32.mrf.mxu0
        %v847 = vpop.f32.mrf.mxu0
        %v848 = vadd.f32 0.0, %v847
        %v849 = vpop.f32.mrf.mxu0
        %850 = vmatprep.mubr.bf16.mxu0 %v708
        %851 = vmatmul.mubr.bf16.gmra.mxu0 %v547
        %v852 = vpop.f32.mrf.mxu0
        %v853 = vadd.f32 0.0, %v852
        %v854 = vpop.f32.mrf.mxu0
        %v855 = vpop.f32.mrf.mxu0
        %v856 = vadd.f32 0.0, %v855
        %v857 = vpop.f32.mrf.mxu0
        %858 = vmatprep.mubr.bf16.mxu0 %v711
        %859 = vmatmul.mubr.bf16.gmra.mxu0 %v549
        %v860 = vpop.f32.mrf.mxu0
        %v861 = vadd.f32 0.0, %v860
        %v862 = vpop.f32.mrf.mxu0
        %v863 = vpop.f32.mrf.mxu0
        %v864 = vadd.f32 0.0, %v863
        %v865 = vpop.f32.mrf.mxu0
        %866 = vmatprep.mubr.bf16.mxu0 %v714
        %867 = vmatmul.mubr.bf16.gmra.mxu0 %v551
        %v868 = vpop.f32.mrf.mxu0
        %v869 = vadd.f32 0.0, %v868
        %v870 = vpop.f32.mrf.mxu0
        %v871 = vpop.f32.mrf.mxu0
        %v872 = vadd.f32 0.0, %v871
        %v873 = vpop.f32.mrf.mxu0
        %874 = vmatprep.mubr.bf16.mxu0 %v717
        %875 = vmatmul.mubr.bf16.gmra.mxu0 %v553
        %v876 = vpop.f32.mrf.mxu0
        %v877 = vadd.f32 0.0, %v876
        %v878 = vpop.f32.mrf.mxu0
        %v879 = vpop.f32.mrf.mxu0
        %v880 = vadd.f32 0.0, %v879
        %v881 = vpop.f32.mrf.mxu0
        %882 = vmatprep.mubr.bf16.mxu0 %v720
        %883 = vmatmul.mubr.bf16.gmra.mxu0 %v555
        %v884 = vpop.f32.mrf.mxu0
        %v885 = vadd.f32 0.0, %v884
        %v886 = vpop.f32.mrf.mxu0
        %v887 = vpop.f32.mrf.mxu0
        %v888 = vadd.f32 0.0, %v887
        %v889 = vpop.f32.mrf.mxu0
        %890 = vmatprep.mubr.bf16.mxu0 %v723
        %891 = vmatmul.mubr.bf16.gmra.mxu0 %v557
        %v892 = vpop.f32.mrf.mxu0
        %v893 = vadd.f32 0.0, %v892
        %v894 = vpop.f32.mrf.mxu0
        %v895 = vpop.f32.mrf.mxu0
        %v896 = vadd.f32 0.0, %v895
        %v897 = vpop.f32.mrf.mxu0
        %898 = vmatprep.mubr.bf16.mxu0 %v726
        %899 = vmatmul.mubr.bf16.gmra.mxu0 %v559
        %v900 = vpop.f32.mrf.mxu0
        %v901 = vadd.f32 0.0, %v900
        %v902 = vpop.f32.mrf.mxu0
        %v903 = vpop.f32.mrf.mxu0
        %v904 = vadd.f32 0.0, %v903
        %v905 = vpop.f32.mrf.mxu0
        %906 = vmatprep.mubr.bf16.mxu0 %v729
        %907 = vmatmul.mubr.bf16.gmra.mxu0 %v561
        %v908 = vpop.f32.mrf.mxu0
        %v909 = vadd.f32 0.0, %v908
        %v910 = vpop.f32.mrf.mxu0
        %v911 = vpop.f32.mrf.mxu0
        %v912 = vadd.f32 0.0, %v911
        %v913 = vpop.f32.mrf.mxu0
        %914 = vmatprep.mubr.bf16.mxu0 %v732
        %915 = vmatmul.mubr.bf16.gmra.mxu0 %v563
        %v916 = vpop.f32.mrf.mxu0
        %v917 = vadd.f32 0.0, %v916
        %v918 = vpop.f32.mrf.mxu0
        %v919 = vpop.f32.mrf.mxu0
        %v920 = vadd.f32 0.0, %v919
        %v921 = vpop.f32.mrf.mxu0
        %922 = vmatprep.mubr.bf16.mxu0 %v735
        %923 = vmatmul.mubr.bf16.gmra.mxu0 %v565
        %v924 = vpop.f32.mrf.mxu0
        %v925 = vadd.f32 0.0, %v924
        %v926 = vpop.f32.mrf.mxu0
        %v927 = vpop.f32.mrf.mxu0
        %v928 = vadd.f32 0.0, %v927
        %v929 = vpop.f32.mrf.mxu0
        %930 = vmatprep.mubr.bf16.mxu0 %v738
        %931 = vmatmul.mubr.bf16.gmra.mxu0 %v567
        %v932 = vpop.f32.mrf.mxu0
        %v933 = vadd.f32 0.0, %v932
        %v934 = vpop.f32.mrf.mxu0
        %v935 = vpop.f32.mrf.mxu0
        %v936 = vadd.f32 0.0, %v935
        %v937 = vpop.f32.mrf.mxu0
        %938 = vmatprep.mubr.bf16.mxu0 %v741
        %939 = vmatmul.mubr.bf16.gmra.mxu0 %v569
        %v940 = vpop.f32.mrf.mxu0
        %v941 = vadd.f32 0.0, %v940
        %v942 = vpop.f32.mrf.mxu0
        %v943 = vpop.f32.mrf.mxu0
        %v944 = vadd.f32 0.0, %v943
        %v945 = vpop.f32.mrf.mxu0
        %946 = vmatprep.mubr.bf16.mxu0 %v744
        %947 = vmatmul.mubr.bf16.gmra.mxu0 %v571
        %v948 = vpop.f32.mrf.mxu0
        %v949 = vadd.f32 0.0, %v948
        %v950 = vpop.f32.mrf.mxu0
        %v951 = vpop.f32.mrf.mxu0
        %v952 = vadd.f32 0.0, %v951
        %v953 = vpop.f32.mrf.mxu0
        %954 = vmatprep.mubr.bf16.mxu0 %v747
        %955 = vmatmul.mubr.bf16.gmra.mxu0 %v573
        %v956 = vpop.f32.mrf.mxu0
        %v957 = vadd.f32 0.0, %v956
        %v958 = vpop.f32.mrf.mxu0
        %v959 = vpop.f32.mrf.mxu0
        %v960 = vadd.f32 0.0, %v959
        %v961 = vpop.f32.mrf.mxu0
        %962 = vmatprep.mubr.bf16.mxu0 %v750
        %963 = vmatmul.mubr.bf16.gmra.mxu0 %v575
        %v964 = vpop.f32.mrf.mxu0
        %v965 = vadd.f32 0.0, %v964
        %v966 = vpop.f32.mrf.mxu0
        %v967 = vpop.f32.mrf.mxu0
        %v968 = vadd.f32 0.0, %v967
        %v969 = vpop.f32.mrf.mxu0
        %970 = vmatprep.mubr.bf16.mxu0 %v753
        %971 = vmatmul.mubr.bf16.gmra.mxu0 %v577
        %v972 = vpop.f32.mrf.mxu0
        %v973 = vadd.f32 0.0, %v972
        %v974 = vpop.f32.mrf.mxu0
        %v975 = vpop.f32.mrf.mxu0
        %v976 = vadd.f32 0.0, %v975
        %v977 = vpop.f32.mrf.mxu0
        %978 = vmatprep.mubr.bf16.mxu0 %v756
        %979 = vmatmul.mubr.bf16.gmra.mxu0 %v579
        %v980 = vpop.f32.mrf.mxu0
        %v981 = vadd.f32 0.0, %v980
        %v982 = vpop.f32.mrf.mxu0
        %v983 = vpop.f32.mrf.mxu0
        %v984 = vadd.f32 0.0, %v983
        %v985 = vpop.f32.mrf.mxu0
        %986 = vmatprep.mubr.bf16.mxu0 %v759
        %987 = vmatmul.mubr.bf16.gmra.mxu0 %v581
        %v988 = vpop.f32.mrf.mxu0
        %v989 = vadd.f32 0.0, %v988
        %v990 = vpop.f32.mrf.mxu0
        %v991 = vpop.f32.mrf.mxu0
        %v992 = vadd.f32 0.0, %v991
        %v993 = vpop.f32.mrf.mxu0
        %994 = vmatprep.mubr.bf16.mxu0 %v762
        %995 = vmatmul.mubr.bf16.gmra.mxu0 %v583
        %v996 = vpop.f32.mrf.mxu0
        %v997 = vadd.f32 0.0, %v996
        %v998 = vpop.f32.mrf.mxu0
        %v999 = vpop.f32.mrf.mxu0
        %v1000 = vadd.f32 0.0, %v999
        %v1001 = vpop.f32.mrf.mxu0
        %1002 = vmatprep.mubr.bf16.mxu0 %v765
        %1003 = vmatmul.mubr.bf16.gmra.mxu0 %v585
        %v1004 = vpop.f32.mrf.mxu0
        %v1005 = vadd.f32 0.0, %v1004
        %v1006 = vpop.f32.mrf.mxu0
        %v1007 = vpop.f32.mrf.mxu0
        %v1008 = vadd.f32 0.0, %v1007
        %v1009 = vpop.f32.mrf.mxu0
        %1010 = vmatprep.mubr.bf16.mxu0 %v768
        %1011 = vmatmul.mubr.bf16.gmra.mxu0 %v587
        %v1012 = vpop.f32.mrf.mxu0
        %v1013 = vadd.f32 0.0, %v1012
        %v1014 = vpop.f32.mrf.mxu0
        %v1015 = vpop.f32.mrf.mxu0
        %v1016 = vadd.f32 0.0, %v1015
        %v1017 = vpop.f32.mrf.mxu0
        %1018 = vmatprep.mubr.bf16.mxu0 %v771
        %1019 = vmatmul.mubr.bf16.gmra.mxu0 %v589
        %v1020 = vpop.f32.mrf.mxu0
        %v1021 = vadd.f32 0.0, %v1020
        %v1022 = vpop.f32.mrf.mxu0
        %v1023 = vpop.f32.mrf.mxu0
        %v1024 = vadd.f32 0.0, %v1023
        %v1025 = vpop.f32.mrf.mxu0
        %1026 = vmatprep.mubr.bf16.mxu0 %v774
        %1027 = vmatmul.mubr.bf16.gmra.mxu0 %v591
        %v1028 = vpop.f32.mrf.mxu0
        %v1029 = vadd.f32 0.0, %v1028
        %v1030 = vpop.f32.mrf.mxu0
        %v1031 = vpop.f32.mrf.mxu0
        %v1032 = vadd.f32 0.0, %v1031
        %v1033 = vpop.f32.mrf.mxu0
        %1034 = vmatprep.mubr.bf16.mxu0 %v777
        %1035 = vmatmul.mubr.bf16.gmra.mxu0 %v593
        %v1036 = vpop.f32.mrf.mxu0
        %v1037 = vadd.f32 0.0, %v1036
        %v1038 = vpop.f32.mrf.mxu0
        %v1039 = vpop.f32.mrf.mxu0
        %v1040 = vadd.f32 0.0, %v1039
        %v1041 = vpop.f32.mrf.mxu0
        %1042 = vmatprep.mubr.bf16.mxu0 %v780
        %1043 = vmatmul.mubr.bf16.gmra.mxu0 %v595
        %v1044 = vpop.f32.mrf.mxu0
        %v1045 = vadd.f32 0.0, %v1044
        %v1046 = vpop.f32.mrf.mxu0
        %v1047 = vpop.f32.mrf.mxu0
        %v1048 = vadd.f32 0.0, %v1047
        %v1049 = vpop.f32.mrf.mxu0
        %1050 = vmatprep.mubr.bf16.mxu0 %v783
        %1051 = vmatmul.mubr.bf16.gmra.mxu0 %v597
        %v1052 = vpop.f32.mrf.mxu0
        %v1053 = vadd.f32 0.0, %v1052
        %v1054 = vpop.f32.mrf.mxu0
        %v1055 = vpop.f32.mrf.mxu0
        %v1056 = vadd.f32 0.0, %v1055
        %v1057 = vpop.f32.mrf.mxu0
        %1058 = vmatprep.mubr.bf16.mxu0 %v786
        %1059 = vmatmul.mubr.bf16.gmra.mxu0 %v599
        %v1060 = vpop.f32.mrf.mxu0
        %v1061 = vadd.f32 0.0, %v1060
        %v1062 = vpop.f32.mrf.mxu0
        %v1063 = vpop.f32.mrf.mxu0
        %v1064 = vadd.f32 0.0, %v1063
        %v1065 = vpop.f32.mrf.mxu0
        %1066 = vmatprep.mubr.bf16.mxu0 %v789
        %1067 = vmatmul.mubr.bf16.gmra.mxu0 %v601
        %v1068 = vpop.f32.mrf.mxu0
        %v1069 = vadd.f32 0.0, %v1068
        %v1070 = vpop.f32.mrf.mxu0
        %v1071 = vpop.f32.mrf.mxu0
        %v1072 = vadd.f32 0.0, %v1071
        %v1073 = vpop.f32.mrf.mxu0
        %1074 = vmatprep.mubr.bf16.mxu0 %v792
        %1075 = vmatmul.mubr.bf16.gmra.mxu0 %v603
        %v1076 = vpop.f32.mrf.mxu0
        %v1077 = vadd.f32 0.0, %v1076
        %v1078 = vpop.f32.mrf.mxu0
        %v1079 = vpop.f32.mrf.mxu0
        %v1080 = vadd.f32 0.0, %v1079
        %v1081 = vpop.f32.mrf.mxu0
        %1082 = vdwg.mxu0
        %v1083 = vpack.c.bf16 %v832, %v829
        %v1084 = vpack.c.bf16 %v840, %v837
        %v1085 = vpack.c.bf16 %v848, %v845
        %v1086 = vpack.c.bf16 %v856, %v853
        %v1087 = vpack.c.bf16 %v864, %v861
        %v1088 = vpack.c.bf16 %v872, %v869
        %v1089 = vpack.c.bf16 %v880, %v877
        %v1090 = vpack.c.bf16 %v888, %v885
        %v1091 = vpack.c.bf16 %v896, %v893
        %v1092 = vpack.c.bf16 %v904, %v901
        %v1093 = vpack.c.bf16 %v912, %v909
        %v1094 = vpack.c.bf16 %v920, %v917
        %v1095 = vpack.c.bf16 %v928, %v925
        %v1096 = vpack.c.bf16 %v936, %v933
        %v1097 = vpack.c.bf16 %v944, %v941
        %v1098 = vpack.c.bf16 %v952, %v949
        %v1099 = vpack.c.bf16 %v960, %v957
        %v1100 = vpack.c.bf16 %v968, %v965
        %v1101 = vpack.c.bf16 %v976, %v973
        %v1102 = vpack.c.bf16 %v984, %v981
        %v1103 = vpack.c.bf16 %v992, %v989
        %v1104 = vpack.c.bf16 %v1000, %v997
        %v1105 = vpack.c.bf16 %v1008, %v1005
        %v1106 = vpack.c.bf16 %v1016, %v1013
        %v1107 = vpack.c.bf16 %v1024, %v1021
        %v1108 = vpack.c.bf16 %v1032, %v1029
        %v1109 = vpack.c.bf16 %v1040, %v1037
        %v1110 = vpack.c.bf16 %v1048, %v1045
        %v1111 = vpack.c.bf16 %v1056, %v1053
        %v1112 = vpack.c.bf16 %v1064, %v1061
        %v1113 = vpack.c.bf16 %v1072, %v1069
        %v1114 = vpack.c.bf16 %v1080, %v1077
        %v1147 = vunpack.c.l.b16 %v1083
        %v1148 = vunpack.c.h.b16 %v1083
        %v1149 = vunpack.c.l.b16 %v1084
        %v1150 = vunpack.c.h.b16 %v1084
        %v1151 = vunpack.c.l.b16 %v1085
        %v1152 = vunpack.c.h.b16 %v1085
        %v1153 = vunpack.c.l.b16 %v1086
        %v1154 = vunpack.c.h.b16 %v1086
        %v1155 = vunpack.c.l.b16 %v1087
        %v1156 = vunpack.c.h.b16 %v1087
        %v1157 = vunpack.c.l.b16 %v1088
        %v1158 = vunpack.c.h.b16 %v1088
        %v1159 = vunpack.c.l.b16 %v1089
        %v1160 = vunpack.c.h.b16 %v1089
        %v1161 = vunpack.c.l.b16 %v1090
        %v1162 = vunpack.c.h.b16 %v1090
        %v1163 = vunpack.c.l.b16 %v1091
        %v1164 = vunpack.c.h.b16 %v1091
        %v1165 = vunpack.c.l.b16 %v1092
        %v1166 = vunpack.c.h.b16 %v1092
        %v1167 = vunpack.c.l.b16 %v1093
        %v1168 = vunpack.c.h.b16 %v1093
        %v1169 = vunpack.c.l.b16 %v1094
        %v1170 = vunpack.c.h.b16 %v1094
        %v1171 = vunpack.c.l.b16 %v1095
        %v1172 = vunpack.c.h.b16 %v1095
        %v1173 = vunpack.c.l.b16 %v1096
        %v1174 = vunpack.c.h.b16 %v1096
        %v1175 = vunpack.c.l.b16 %v1097
        %v1176 = vunpack.c.h.b16 %v1097
        %v1177 = vunpack.c.l.b16 %v1098
        %v1178 = vunpack.c.h.b16 %v1098
        %v1179 = vunpack.c.l.b16 %v1099
        %v1180 = vunpack.c.h.b16 %v1099
        %v1181 = vunpack.c.l.b16 %v1100
        %v1182 = vunpack.c.h.b16 %v1100
        %v1183 = vunpack.c.l.b16 %v1101
        %v1184 = vunpack.c.h.b16 %v1101
        %v1185 = vunpack.c.l.b16 %v1102
        %v1186 = vunpack.c.h.b16 %v1102
        %v1187 = vunpack.c.l.b16 %v1103
        %v1188 = vunpack.c.h.b16 %v1103
        %v1189 = vunpack.c.l.b16 %v1104
        %v1190 = vunpack.c.h.b16 %v1104
        %v1191 = vunpack.c.l.b16 %v1105
        %v1192 = vunpack.c.h.b16 %v1105
        %v1193 = vunpack.c.l.b16 %v1106
        %v1194 = vunpack.c.h.b16 %v1106
        %v1195 = vunpack.c.l.b16 %v1107
        %v1196 = vunpack.c.h.b16 %v1107
        %v1197 = vunpack.c.l.b16 %v1108
        %v1198 = vunpack.c.h.b16 %v1108
        %v1199 = vunpack.c.l.b16 %v1109
        %v1200 = vunpack.c.h.b16 %v1109
        %v1201 = vunpack.c.l.b16 %v1110
        %v1202 = vunpack.c.h.b16 %v1110
        %v1203 = vunpack.c.l.b16 %v1111
        %v1204 = vunpack.c.h.b16 %v1111
        %v1205 = vunpack.c.l.b16 %v1112
        %v1206 = vunpack.c.h.b16 %v1112
        %v1207 = vunpack.c.l.b16 %v1113
        %v1208 = vunpack.c.h.b16 %v1113
        %v1209 = vunpack.c.l.b16 %v1114
        %v1210 = vunpack.c.h.b16 %v1114
        %v1211 = vpack.c.b16 %v1147, %v1147
        %v1212 = vpack.c.b16 %v1148, %v1148
        %v1213 = vpack.c.b16 %v1149, %v1149
        %v1214 = vpack.c.b16 %v1150, %v1150
        %v1215 = vpack.c.b16 %v1151, %v1151
        %v1216 = vpack.c.b16 %v1152, %v1152
        %v1217 = vpack.c.b16 %v1153, %v1153
        %v1218 = vpack.c.b16 %v1154, %v1154
        %v1219 = vpack.c.b16 %v1155, %v1155
        %v1220 = vpack.c.b16 %v1156, %v1156
        %v1221 = vpack.c.b16 %v1157, %v1157
        %v1222 = vpack.c.b16 %v1158, %v1158
        %v1223 = vpack.c.b16 %v1159, %v1159
        %v1224 = vpack.c.b16 %v1160, %v1160
        %v1225 = vpack.c.b16 %v1161, %v1161
        %v1226 = vpack.c.b16 %v1162, %v1162
        %v1227 = vpack.c.b16 %v1163, %v1163
        %v1228 = vpack.c.b16 %v1164, %v1164
        %v1229 = vpack.c.b16 %v1165, %v1165
        %v1230 = vpack.c.b16 %v1166, %v1166
        %v1231 = vpack.c.b16 %v1167, %v1167
        %v1232 = vpack.c.b16 %v1168, %v1168
        %v1233 = vpack.c.b16 %v1169, %v1169
        %v1234 = vpack.c.b16 %v1170, %v1170
        %v1235 = vpack.c.b16 %v1171, %v1171
        %v1236 = vpack.c.b16 %v1172, %v1172
        %v1237 = vpack.c.b16 %v1173, %v1173
        %v1238 = vpack.c.b16 %v1174, %v1174
        %v1239 = vpack.c.b16 %v1175, %v1175
        %v1240 = vpack.c.b16 %v1176, %v1176
        %v1241 = vpack.c.b16 %v1177, %v1177
        %v1242 = vpack.c.b16 %v1178, %v1178
        %v1243 = vpack.c.b16 %v1179, %v1179
        %v1244 = vpack.c.b16 %v1180, %v1180
        %v1245 = vpack.c.b16 %v1181, %v1181
        %v1246 = vpack.c.b16 %v1182, %v1182
        %v1247 = vpack.c.b16 %v1183, %v1183
        %v1248 = vpack.c.b16 %v1184, %v1184
        %v1249 = vpack.c.b16 %v1185, %v1185
        %v1250 = vpack.c.b16 %v1186, %v1186
        %v1251 = vpack.c.b16 %v1187, %v1187
        %v1252 = vpack.c.b16 %v1188, %v1188
        %v1253 = vpack.c.b16 %v1189, %v1189
        %v1254 = vpack.c.b16 %v1190, %v1190
        %v1255 = vpack.c.b16 %v1191, %v1191
        %v1256 = vpack.c.b16 %v1192, %v1192
        %v1257 = vpack.c.b16 %v1193, %v1193
        %v1258 = vpack.c.b16 %v1194, %v1194
        %v1259 = vpack.c.b16 %v1195, %v1195
        %v1260 = vpack.c.b16 %v1196, %v1196
        %v1261 = vpack.c.b16 %v1197, %v1197
        %v1262 = vpack.c.b16 %v1198, %v1198
        %v1263 = vpack.c.b16 %v1199, %v1199
        %v1264 = vpack.c.b16 %v1200, %v1200
        %v1265 = vpack.c.b16 %v1201, %v1201
        %v1266 = vpack.c.b16 %v1202, %v1202
        %v1267 = vpack.c.b16 %v1203, %v1203
        %v1268 = vpack.c.b16 %v1204, %v1204
        %v1269 = vpack.c.b16 %v1205, %v1205
        %v1270 = vpack.c.b16 %v1206, %v1206
        %v1271 = vpack.c.b16 %v1207, %v1207
        %v1272 = vpack.c.b16 %v1208, %v1208
        %v1273 = vpack.c.b16 %v1209, %v1209
        %v1274 = vpack.c.b16 %v1210, %v1210
        %vm1339 = vcmask 519168
        %1340 = vst.msk [vmem:[%s262] sm:$0xf] %vm1339, %v1211
        %1341 = vst.msk [vmem:[%s262 + $0x4] sm:$0xf] %vm1339, %v1212
        %1342 = vst.msk [vmem:[%s262 + $0x8] sm:$0xf] %vm1339, %v1213
        %1343 = vst.msk [vmem:[%s262 + $0xc] sm:$0xf] %vm1339, %v1214
        %1344 = vst.msk [vmem:[%s262 + $0x10] sm:$0xf] %vm1339, %v1215
        %1345 = vst.msk [vmem:[%s262 + $0x14] sm:$0xf] %vm1339, %v1216
        %1346 = vst.msk [vmem:[%s262 + $0x18] sm:$0xf] %vm1339, %v1217
        %1347 = vst.msk [vmem:[%s262 + $0x1c] sm:$0xf] %vm1339, %v1218
        %1348 = vst.msk [vmem:[%s262 + $0x20] sm:$0xf] %vm1339, %v1219
        %1349 = vst.msk [vmem:[%s262 + $0x24] sm:$0xf] %vm1339, %v1220
        %1350 = vst.msk [vmem:[%s262 + $0x28] sm:$0xf] %vm1339, %v1221
        %1351 = vst.msk [vmem:[%s262 + $0x2c] sm:$0xf] %vm1339, %v1222
        %1352 = vst.msk [vmem:[%s262 + $0x30] sm:$0xf] %vm1339, %v1223
        %1353 = vst.msk [vmem:[%s262 + $0x34] sm:$0xf] %vm1339, %v1224
        %1354 = vst.msk [vmem:[%s262 + $0x38] sm:$0xf] %vm1339, %v1225
        %1355 = vst.msk [vmem:[%s262 + $0x3c] sm:$0xf] %vm1339, %v1226
        %1356 = vst.msk [vmem:[%s262 + $0x40] sm:$0xf] %vm1339, %v1227
        %1357 = vst.msk [vmem:[%s262 + $0x44] sm:$0xf] %vm1339, %v1228
        %1358 = vst.msk [vmem:[%s262 + $0x48] sm:$0xf] %vm1339, %v1229
        %1359 = vst.msk [vmem:[%s262 + $0x4c] sm:$0xf] %vm1339, %v1230
        %1360 = vst.msk [vmem:[%s262 + $0x50] sm:$0xf] %vm1339, %v1231
        %1361 = vst.msk [vmem:[%s262 + $0x54] sm:$0xf] %vm1339, %v1232
        %1362 = vst.msk [vmem:[%s262 + $0x58] sm:$0xf] %vm1339, %v1233
        %1363 = vst.msk [vmem:[%s262 + $0x5c] sm:$0xf] %vm1339, %v1234
        %1364 = vst.msk [vmem:[%s262 + $0x60] sm:$0xf] %vm1339, %v1235
        %1365 = vst.msk [vmem:[%s262 + $0x64] sm:$0xf] %vm1339, %v1236
        %1366 = vst.msk [vmem:[%s262 + $0x68] sm:$0xf] %vm1339, %v1237
        %1367 = vst.msk [vmem:[%s262 + $0x6c] sm:$0xf] %vm1339, %v1238
        %1368 = vst.msk [vmem:[%s262 + $0x70] sm:$0xf] %vm1339, %v1239
        %1369 = vst.msk [vmem:[%s262 + $0x74] sm:$0xf] %vm1339, %v1240
        %1370 = vst.msk [vmem:[%s262 + $0x78] sm:$0xf] %vm1339, %v1241
        %1371 = vst.msk [vmem:[%s262 + $0x7c] sm:$0xf] %vm1339, %v1242
        %1372 = vst.msk [vmem:[%s262 + $0x80] sm:$0xf] %vm1339, %v1243
        %1373 = vst.msk [vmem:[%s262 + $0x84] sm:$0xf] %vm1339, %v1244
        %1374 = vst.msk [vmem:[%s262 + $0x88] sm:$0xf] %vm1339, %v1245
        %1375 = vst.msk [vmem:[%s262 + $0x8c] sm:$0xf] %vm1339, %v1246
        %1376 = vst.msk [vmem:[%s262 + $0x90] sm:$0xf] %vm1339, %v1247
        %1377 = vst.msk [vmem:[%s262 + $0x94] sm:$0xf] %vm1339, %v1248
        %1378 = vst.msk [vmem:[%s262 + $0x98] sm:$0xf] %vm1339, %v1249
        %1379 = vst.msk [vmem:[%s262 + $0x9c] sm:$0xf] %vm1339, %v1250
        %1380 = vst.msk [vmem:[%s262 + $0xa0] sm:$0xf] %vm1339, %v1251
        %1381 = vst.msk [vmem:[%s262 + $0xa4] sm:$0xf] %vm1339, %v1252
        %1382 = vst.msk [vmem:[%s262 + $0xa8] sm:$0xf] %vm1339, %v1253
        %1383 = vst.msk [vmem:[%s262 + $0xac] sm:$0xf] %vm1339, %v1254
        %1384 = vst.msk [vmem:[%s262 + $0xb0] sm:$0xf] %vm1339, %v1255
        %1385 = vst.msk [vmem:[%s262 + $0xb4] sm:$0xf] %vm1339, %v1256
        %1386 = vst.msk [vmem:[%s262 + $0xb8] sm:$0xf] %vm1339, %v1257
        %1387 = vst.msk [vmem:[%s262 + $0xbc] sm:$0xf] %vm1339, %v1258
        %1388 = vst.msk [vmem:[%s262 + $0xc0] sm:$0xf] %vm1339, %v1259
        %1389 = vst.msk [vmem:[%s262 + $0xc4] sm:$0xf] %vm1339, %v1260
        %1390 = vst.msk [vmem:[%s262 + $0xc8] sm:$0xf] %vm1339, %v1261
        %1391 = vst.msk [vmem:[%s262 + $0xcc] sm:$0xf] %vm1339, %v1262
        %1392 = vst.msk [vmem:[%s262 + $0xd0] sm:$0xf] %vm1339, %v1263
        %1393 = vst.msk [vmem:[%s262 + $0xd4] sm:$0xf] %vm1339, %v1264
        %1394 = vst.msk [vmem:[%s262 + $0xd8] sm:$0xf] %vm1339, %v1265
        %1395 = vst.msk [vmem:[%s262 + $0xdc] sm:$0xf] %vm1339, %v1266
        %1396 = vst.msk [vmem:[%s262 + $0xe0] sm:$0xf] %vm1339, %v1267
        %1397 = vst.msk [vmem:[%s262 + $0xe4] sm:$0xf] %vm1339, %v1268
        %1398 = vst.msk [vmem:[%s262 + $0xe8] sm:$0xf] %vm1339, %v1269
        %1399 = vst.msk [vmem:[%s262 + $0xec] sm:$0xf] %vm1339, %v1270
        %1400 = vst.msk [vmem:[%s262 + $0xf0] sm:$0xf] %vm1339, %v1271
        %1401 = vst.msk [vmem:[%s262 + $0xf4] sm:$0xf] %vm1339, %v1272
        %1402 = vst.msk [vmem:[%s262 + $0xf8] sm:$0xf] %vm1339, %v1273
        %1403 = vst.msk [vmem:[%s262 + $0xfc] sm:$0xf] %vm1339, %v1274
        %vm1404 = vcmask 523264
        %v1405 = vsel %vm1404, %v829, 0.0
        %v1406 = vsel %vm1404, %v832, 0.0
        %v1407 = vadd.f32 %v1405, %v1406
        %v1408 = vsel %vm1404, %v837, 0.0
        %v1409 = vadd.f32 %v1407, %v1408
        %v1410 = vsel %vm1404, %v840, 0.0
        %v1411 = vadd.f32 %v1409, %v1410
        %v1412 = vsel %vm1404, %v845, 0.0
        %v1413 = vadd.f32 %v1411, %v1412
        %v1414 = vsel %vm1404, %v848, 0.0
        %v1415 = vadd.f32 %v1413, %v1414
        %v1416 = vsel %vm1404, %v853, 0.0
        %v1417 = vadd.f32 %v1415, %v1416
        %v1418 = vsel %vm1404, %v856, 0.0
        %v1419 = vadd.f32 %v1417, %v1418
        %v1420 = vsel %vm1404, %v861, 0.0
        %v1421 = vadd.f32 %v1419, %v1420
        %v1422 = vsel %vm1404, %v864, 0.0
        %v1423 = vadd.f32 %v1421, %v1422
        %v1424 = vsel %vm1404, %v869, 0.0
        %v1425 = vadd.f32 %v1423, %v1424
        %v1426 = vsel %vm1404, %v872, 0.0
        %v1427 = vadd.f32 %v1425, %v1426
        %v1428 = vsel %vm1404, %v877, 0.0
        %v1429 = vadd.f32 %v1427, %v1428
        %v1430 = vsel %vm1404, %v880, 0.0
        %v1431 = vadd.f32 %v1429, %v1430
        %v1432 = vsel %vm1404, %v885, 0.0
        %v1433 = vadd.f32 %v1431, %v1432
        %v1434 = vsel %vm1404, %v888, 0.0
        %v1435 = vadd.f32 %v1433, %v1434
        %v1436 = vsel %vm1404, %v893, 0.0
        %v1437 = vadd.f32 %v1435, %v1436
        %v1438 = vsel %vm1404, %v896, 0.0
        %v1439 = vadd.f32 %v1437, %v1438
        %v1440 = vsel %vm1404, %v901, 0.0
        %v1441 = vadd.f32 %v1439, %v1440
        %v1442 = vsel %vm1404, %v904, 0.0
        %v1443 = vadd.f32 %v1441, %v1442
        %v1444 = vsel %vm1404, %v909, 0.0
        %v1445 = vadd.f32 %v1443, %v1444
        %v1446 = vsel %vm1404, %v912, 0.0
        %v1447 = vadd.f32 %v1445, %v1446
        %v1448 = vsel %vm1404, %v917, 0.0
        %v1449 = vadd.f32 %v1447, %v1448
        %v1450 = vsel %vm1404, %v920, 0.0
        %v1451 = vadd.f32 %v1449, %v1450
        %v1452 = vsel %vm1404, %v925, 0.0
        %v1453 = vadd.f32 %v1451, %v1452
        %v1454 = vsel %vm1404, %v928, 0.0
        %v1455 = vadd.f32 %v1453, %v1454
        %v1456 = vsel %vm1404, %v933, 0.0
        %v1457 = vadd.f32 %v1455, %v1456
        %v1458 = vsel %vm1404, %v936, 0.0
        %v1459 = vadd.f32 %v1457, %v1458
        %v1460 = vsel %vm1404, %v941, 0.0
        %v1461 = vadd.f32 %v1459, %v1460
        %v1462 = vsel %vm1404, %v944, 0.0
        %v1463 = vadd.f32 %v1461, %v1462
        %v1464 = vsel %vm1404, %v949, 0.0
        %v1465 = vadd.f32 %v1463, %v1464
        %v1466 = vsel %vm1404, %v952, 0.0
        %v1467 = vadd.f32 %v1465, %v1466
        %v1468 = vsel %vm1404, %v957, 0.0
        %v1469 = vadd.f32 %v1467, %v1468
        %v1470 = vsel %vm1404, %v960, 0.0
        %v1471 = vadd.f32 %v1469, %v1470
        %v1472 = vsel %vm1404, %v965, 0.0
        %v1473 = vadd.f32 %v1471, %v1472
        %v1474 = vsel %vm1404, %v968, 0.0
        %v1475 = vadd.f32 %v1473, %v1474
        %v1476 = vsel %vm1404, %v973, 0.0
        %v1477 = vadd.f32 %v1475, %v1476
        %v1478 = vsel %vm1404, %v976, 0.0
        %v1479 = vadd.f32 %v1477, %v1478
        %v1480 = vsel %vm1404, %v981, 0.0
        %v1481 = vadd.f32 %v1479, %v1480
        %v1482 = vsel %vm1404, %v984, 0.0
        %v1483 = vadd.f32 %v1481, %v1482
        %v1484 = vsel %vm1404, %v989, 0.0
        %v1485 = vadd.f32 %v1483, %v1484
        %v1486 = vsel %vm1404, %v992, 0.0
        %v1487 = vadd.f32 %v1485, %v1486
        %v1488 = vsel %vm1404, %v997, 0.0
        %v1489 = vadd.f32 %v1487, %v1488
        %v1490 = vsel %vm1404, %v1000, 0.0
        %v1491 = vadd.f32 %v1489, %v1490
        %v1492 = vsel %vm1404, %v1005, 0.0
        %v1493 = vadd.f32 %v1491, %v1492
        %v1494 = vsel %vm1404, %v1008, 0.0
        %v1495 = vadd.f32 %v1493, %v1494
        %v1496 = vsel %vm1404, %v1013, 0.0
        %v1497 = vadd.f32 %v1495, %v1496
        %v1498 = vsel %vm1404, %v1016, 0.0
        %v1499 = vadd.f32 %v1497, %v1498
        %v1500 = vsel %vm1404, %v1021, 0.0
        %v1501 = vadd.f32 %v1499, %v1500
        %v1502 = vsel %vm1404, %v1024, 0.0
        %v1503 = vadd.f32 %v1501, %v1502
        %v1504 = vsel %vm1404, %v1029, 0.0
        %v1505 = vadd.f32 %v1503, %v1504
        %v1506 = vsel %vm1404, %v1032, 0.0
        %v1507 = vadd.f32 %v1505, %v1506
        %v1508 = vsel %vm1404, %v1037, 0.0
        %v1509 = vadd.f32 %v1507, %v1508
        %v1510 = vsel %vm1404, %v1040, 0.0
        %v1511 = vadd.f32 %v1509, %v1510
        %v1512 = vsel %vm1404, %v1045, 0.0
        %v1513 = vadd.f32 %v1511, %v1512
        %v1514 = vsel %vm1404, %v1048, 0.0
        %v1515 = vadd.f32 %v1513, %v1514
        %v1516 = vsel %vm1404, %v1053, 0.0
        %v1517 = vadd.f32 %v1515, %v1516
        %v1518 = vsel %vm1404, %v1056, 0.0
        %v1519 = vadd.f32 %v1517, %v1518
        %v1520 = vsel %vm1404, %v1061, 0.0
        %v1521 = vadd.f32 %v1519, %v1520
        %v1522 = vsel %vm1404, %v1064, 0.0
        %v1523 = vadd.f32 %v1521, %v1522
        %v1524 = vsel %vm1404, %v1069, 0.0
        %v1525 = vadd.f32 %v1523, %v1524
        %v1526 = vsel %vm1404, %v1072, 0.0
        %v1527 = vadd.f32 %v1525, %v1526
        %v1528 = vsel %vm1404, %v1077, 0.0
        %v1529 = vadd.f32 %v1527, %v1528
        %v1530 = vsel %vm1404, %v1080, 0.0
        %v1531 = vadd.f32 %v1529, %v1530
        %v1532 = vrot.slane %v1531, 4
        %v1533 = vadd.f32 %v1531, %v1532
        %v1534 = vrot.slane %v1533, 2
        %v1535 = vadd.f32 %v1533, %v1534
        %v1536 = vrot.slane %v1535, 1
        %v1537 = vadd.f32 %v1535, %v1536
        %vm1538 = vcmask 516096
        %1539 = vst.msk [vmem:[%s237] sm:$0x1] %vm1538, %v1537
        %v1540 = vmul.f32 %v829, %v829
        %v1541 = vmul.f32 %v832, %v832
        %v1542 = vmul.f32 %v837, %v837
        %v1543 = vmul.f32 %v840, %v840
        %v1544 = vmul.f32 %v845, %v845
        %v1545 = vmul.f32 %v848, %v848
        %v1546 = vmul.f32 %v853, %v853
        %v1547 = vmul.f32 %v856, %v856
        %v1548 = vmul.f32 %v861, %v861
        %v1549 = vmul.f32 %v864, %v864
        %v1550 = vmul.f32 %v869, %v869
        %v1551 = vmul.f32 %v872, %v872
        %v1552 = vmul.f32 %v877, %v877
        %v1553 = vmul.f32 %v880, %v880
        %v1554 = vmul.f32 %v885, %v885
        %v1555 = vmul.f32 %v888, %v888
        %v1556 = vmul.f32 %v893, %v893
        %v1557 = vmul.f32 %v896, %v896
        %v1558 = vmul.f32 %v901, %v901
        %v1559 = vmul.f32 %v904, %v904
        %v1560 = vmul.f32 %v909, %v909
        %v1561 = vmul.f32 %v912, %v912
        %v1562 = vmul.f32 %v917, %v917
        %v1563 = vmul.f32 %v920, %v920
        %v1564 = vmul.f32 %v925, %v925
        %v1565 = vmul.f32 %v928, %v928
        %v1566 = vmul.f32 %v933, %v933
        %v1567 = vmul.f32 %v936, %v936
        %v1568 = vmul.f32 %v941, %v941
        %v1569 = vmul.f32 %v944, %v944
        %v1570 = vmul.f32 %v949, %v949
        %v1571 = vmul.f32 %v952, %v952
        %v1572 = vmul.f32 %v957, %v957
        %v1573 = vmul.f32 %v960, %v960
        %v1574 = vmul.f32 %v965, %v965
        %v1575 = vmul.f32 %v968, %v968
        %v1576 = vmul.f32 %v973, %v973
        %v1577 = vmul.f32 %v976, %v976
        %v1578 = vmul.f32 %v981, %v981
        %v1579 = vmul.f32 %v984, %v984
        %v1580 = vmul.f32 %v989, %v989
        %v1581 = vmul.f32 %v992, %v992
        %v1582 = vmul.f32 %v997, %v997
        %v1583 = vmul.f32 %v1000, %v1000
        %v1584 = vmul.f32 %v1005, %v1005
        %v1585 = vmul.f32 %v1008, %v1008
        %v1586 = vmul.f32 %v1013, %v1013
        %v1587 = vmul.f32 %v1016, %v1016
        %v1588 = vmul.f32 %v1021, %v1021
        %v1589 = vmul.f32 %v1024, %v1024
        %v1590 = vmul.f32 %v1029, %v1029
        %v1591 = vmul.f32 %v1032, %v1032
        %v1592 = vmul.f32 %v1037, %v1037
        %v1593 = vmul.f32 %v1040, %v1040
        %v1594 = vmul.f32 %v1045, %v1045
        %v1595 = vmul.f32 %v1048, %v1048
        %v1596 = vmul.f32 %v1053, %v1053
        %v1597 = vmul.f32 %v1056, %v1056
        %v1598 = vmul.f32 %v1061, %v1061
        %v1599 = vmul.f32 %v1064, %v1064
        %v1600 = vmul.f32 %v1069, %v1069
        %v1601 = vmul.f32 %v1072, %v1072
        %v1602 = vmul.f32 %v1077, %v1077
        %v1603 = vmul.f32 %v1080, %v1080
        %v1604 = vsel %vm1404, %v1540, 0.0
        %v1605 = vsel %vm1404, %v1541, 0.0
        %v1606 = vadd.f32 %v1604, %v1605
        %v1607 = vsel %vm1404, %v1542, 0.0
        %v1608 = vadd.f32 %v1606, %v1607
        %v1609 = vsel %vm1404, %v1543, 0.0
        %v1610 = vadd.f32 %v1608, %v1609
        %v1611 = vsel %vm1404, %v1544, 0.0
        %v1612 = vadd.f32 %v1610, %v1611
        %v1613 = vsel %vm1404, %v1545, 0.0
        %v1614 = vadd.f32 %v1612, %v1613
        %v1615 = vsel %vm1404, %v1546, 0.0
        %v1616 = vadd.f32 %v1614, %v1615
        %v1617 = vsel %vm1404, %v1547, 0.0
        %v1618 = vadd.f32 %v1616, %v1617
        %v1619 = vsel %vm1404, %v1548, 0.0
        %v1620 = vadd.f32 %v1618, %v1619
        %v1621 = vsel %vm1404, %v1549, 0.0
        %v1622 = vadd.f32 %v1620, %v1621
        %v1623 = vsel %vm1404, %v1550, 0.0
        %v1624 = vadd.f32 %v1622, %v1623
        %v1625 = vsel %vm1404, %v1551, 0.0
        %v1626 = vadd.f32 %v1624, %v1625
        %v1627 = vsel %vm1404, %v1552, 0.0
        %v1628 = vadd.f32 %v1626, %v1627
        %v1629 = vsel %vm1404, %v1553, 0.0
        %v1630 = vadd.f32 %v1628, %v1629
        %v1631 = vsel %vm1404, %v1554, 0.0
        %v1632 = vadd.f32 %v1630, %v1631
        %v1633 = vsel %vm1404, %v1555, 0.0
        %v1634 = vadd.f32 %v1632, %v1633
        %v1635 = vsel %vm1404, %v1556, 0.0
        %v1636 = vadd.f32 %v1634, %v1635
        %v1637 = vsel %vm1404, %v1557, 0.0
        %v1638 = vadd.f32 %v1636, %v1637
        %v1639 = vsel %vm1404, %v1558, 0.0
        %v1640 = vadd.f32 %v1638, %v1639
        %v1641 = vsel %vm1404, %v1559, 0.0
        %v1642 = vadd.f32 %v1640, %v1641
        %v1643 = vsel %vm1404, %v1560, 0.0
        %v1644 = vadd.f32 %v1642, %v1643
        %v1645 = vsel %vm1404, %v1561, 0.0
        %v1646 = vadd.f32 %v1644, %v1645
        %v1647 = vsel %vm1404, %v1562, 0.0
        %v1648 = vadd.f32 %v1646, %v1647
        %v1649 = vsel %vm1404, %v1563, 0.0
        %v1650 = vadd.f32 %v1648, %v1649
        %v1651 = vsel %vm1404, %v1564, 0.0
        %v1652 = vadd.f32 %v1650, %v1651
        %v1653 = vsel %vm1404, %v1565, 0.0
        %v1654 = vadd.f32 %v1652, %v1653
        %v1655 = vsel %vm1404, %v1566, 0.0
        %v1656 = vadd.f32 %v1654, %v1655
        %v1657 = vsel %vm1404, %v1567, 0.0
        %v1658 = vadd.f32 %v1656, %v1657
        %v1659 = vsel %vm1404, %v1568, 0.0
        %v1660 = vadd.f32 %v1658, %v1659
        %v1661 = vsel %vm1404, %v1569, 0.0
        %v1662 = vadd.f32 %v1660, %v1661
        %v1663 = vsel %vm1404, %v1570, 0.0
        %v1664 = vadd.f32 %v1662, %v1663
        %v1665 = vsel %vm1404, %v1571, 0.0
        %v1666 = vadd.f32 %v1664, %v1665
        %v1667 = vsel %vm1404, %v1572, 0.0
        %v1668 = vadd.f32 %v1666, %v1667
        %v1669 = vsel %vm1404, %v1573, 0.0
        %v1670 = vadd.f32 %v1668, %v1669
        %v1671 = vsel %vm1404, %v1574, 0.0
        %v1672 = vadd.f32 %v1670, %v1671
        %v1673 = vsel %vm1404, %v1575, 0.0
        %v1674 = vadd.f32 %v1672, %v1673
        %v1675 = vsel %vm1404, %v1576, 0.0
        %v1676 = vadd.f32 %v1674, %v1675
        %v1677 = vsel %vm1404, %v1577, 0.0
        %v1678 = vadd.f32 %v1676, %v1677
        %v1679 = vsel %vm1404, %v1578, 0.0
        %v1680 = vadd.f32 %v1678, %v1679
        %v1681 = vsel %vm1404, %v1579, 0.0
        %v1682 = vadd.f32 %v1680, %v1681
        %v1683 = vsel %vm1404, %v1580, 0.0
        %v1684 = vadd.f32 %v1682, %v1683
        %v1685 = vsel %vm1404, %v1581, 0.0
        %v1686 = vadd.f32 %v1684, %v1685
        %v1687 = vsel %vm1404, %v1582, 0.0
        %v1688 = vadd.f32 %v1686, %v1687
        %v1689 = vsel %vm1404, %v1583, 0.0
        %v1690 = vadd.f32 %v1688, %v1689
        %v1691 = vsel %vm1404, %v1584, 0.0
        %v1692 = vadd.f32 %v1690, %v1691
        %v1693 = vsel %vm1404, %v1585, 0.0
        %v1694 = vadd.f32 %v1692, %v1693
        %v1695 = vsel %vm1404, %v1586, 0.0
        %v1696 = vadd.f32 %v1694, %v1695
        %v1697 = vsel %vm1404, %v1587, 0.0
        %v1698 = vadd.f32 %v1696, %v1697
        %v1699 = vsel %vm1404, %v1588, 0.0
        %v1700 = vadd.f32 %v1698, %v1699
        %v1701 = vsel %vm1404, %v1589, 0.0
        %v1702 = vadd.f32 %v1700, %v1701
        %v1703 = vsel %vm1404, %v1590, 0.0
        %v1704 = vadd.f32 %v1702, %v1703
        %v1705 = vsel %vm1404, %v1591, 0.0
        %v1706 = vadd.f32 %v1704, %v1705
        %v1707 = vsel %vm1404, %v1592, 0.0
        %v1708 = vadd.f32 %v1706, %v1707
        %v1709 = vsel %vm1404, %v1593, 0.0
        %v1710 = vadd.f32 %v1708, %v1709
        %v1711 = vsel %vm1404, %v1594, 0.0
        %v1712 = vadd.f32 %v1710, %v1711
        %v1713 = vsel %vm1404, %v1595, 0.0
        %v1714 = vadd.f32 %v1712, %v1713
        %v1715 = vsel %vm1404, %v1596, 0.0
        %v1716 = vadd.f32 %v1714, %v1715
        %v1717 = vsel %vm1404, %v1597, 0.0
        %v1718 = vadd.f32 %v1716, %v1717
        %v1719 = vsel %vm1404, %v1598, 0.0
        %v1720 = vadd.f32 %v1718, %v1719
        %v1721 = vsel %vm1404, %v1599, 0.0
        %v1722 = vadd.f32 %v1720, %v1721
        %v1723 = vsel %vm1404, %v1600, 0.0
        %v1724 = vadd.f32 %v1722, %v1723
        %v1725 = vsel %vm1404, %v1601, 0.0
        %v1726 = vadd.f32 %v1724, %v1725
        %v1727 = vsel %vm1404, %v1602, 0.0
        %v1728 = vadd.f32 %v1726, %v1727
        %v1729 = vsel %vm1404, %v1603, 0.0
        %v1730 = vadd.f32 %v1728, %v1729
        %v1731 = vrot.slane %v1730, 4
        %v1732 = vadd.f32 %v1730, %v1731
        %v1733 = vrot.slane %v1732, 2
        %v1734 = vadd.f32 %v1732, %v1733
        %v1735 = vrot.slane %v1734, 1
        %v1736 = vadd.f32 %v1734, %v1735
        %1737 = vst.msk [vmem:[%s243] sm:$0x1] %vm1538, %v1736
        %s1738 = smul.u32 64, %s26
        %p1739 = scmp.lt.s32.totalorder %s1738, 255
        %s1740 = scalar_select %p1739, %s1738, 255
        %p1741 = scmp.lt.s32.totalorder %s27, 0
        %s1742 = scalar_select %p1741, %s27, 0
        %s1743 = sadd.s32 %s1742, %s1740
        %s1744 = smul.addr %s1743, 4
        %s1745 = scalar_lea.vmem %s2, %s1744
        %s1746 = sand.u32 %s124, 1
        %s1747 = scalar_lea.sflag [#allocation3], %s1746
        %s1748 = sand.u32 %s124, 1
        %s1749 = scalar_lea.vmem [#allocation2], %s1748
        %s1750 = sand.u32 %s152, 1
        %s1751 = scalar_lea.sflag [#allocation5], %s1750
        %s1752 = sand.u32 %s152, 1
        %s1753 = scalar_lea.vmem [#allocation4], %s1752
        // Predicated region
        $region29: #{tpu_custom_call.1} parent=27 // pred_check
          %p1754 = pneg %p106
        $region30: #{tpu_custom_call.1} parent=27 // pred_check_branch
          %1756 = sbr.rel (%p1754) target = $region32
        $region31: #{tpu_custom_call.1} parent=27 // pred_region
          %s1757 = smul.u32 64, %s26
        $region32: #{tpu_custom_call.1} parent=27 // pred_fallthru
          _
        // Predicated region
        $region33: #{tpu_custom_call.1} parent=27 // pred_check
          %p1758 = pneg %p134
        $region34: #{tpu_custom_call.1} parent=27 // pred_check_branch
          %1760 = sbr.rel (%p1758) target = $region36
        $region35: #{tpu_custom_call.1} parent=27 // pred_region
          %s1762 = ssub.s32 16, 16
          %1763 = vsyncadd %s1747, %s1762
          %s1764 = sadd.s32 %s27, %s26
          %s1765 = smul.addr %s1764, 16
          %s1766 = scalar_lea.hbm %s3, %s1765
          %s1768 = sshll.u32 %s1749, 4
          %s1769 = int_to_ptr.vmem [resolvable:$true] %s1768
          %1771 = dma.vmem_to_hbm [thread:$0]  %s1769, 16, %s1766, %s1747
        $region36: #{tpu_custom_call.1} parent=27 // pred_fallthru
          _
        // Predicated region
        $region37: #{tpu_custom_call.1} parent=27 // pred_check
          %p1772 = pneg %p162
        $region38: #{tpu_custom_call.1} parent=27 // pred_check_branch
          %1774 = sbr.rel (%p1772) target = $region40
        $region39: #{tpu_custom_call.1} parent=27 // pred_region
          %s1776 = ssub.s32 16, 16
          %1777 = vsyncadd %s1751, %s1776
          %s1778 = sadd.s32 %s27, %s26
          %s1779 = smul.addr %s1778, 16
          %s1780 = scalar_lea.hbm %s4, %s1779
          %s1782 = sshll.u32 %s1753, 4
          %s1783 = int_to_ptr.vmem [resolvable:$true] %s1782
          %1785 = dma.vmem_to_hbm [thread:$0]  %s1783, 16, %s1780, %s1751
        $region40: #{tpu_custom_call.1} parent=27 // pred_fallthru
          _
      $region28: #{tpu_custom_call.1} parent=5 // pred_fallthru
        _
      %p1786 = scmp.le.s32.totalorder 2, %s17
      // Predicated region
      $region41: #{tpu_custom_call.1} parent=5 // pred_check
        %p1787 = pneg %p1786
      $region42: #{tpu_custom_call.1} parent=5 // pred_check_branch
        %1789 = sbr.rel (%p1787) target = $region44
      $region43: #{tpu_custom_call.1} parent=5 // pred_region
        %s1790 = ssub.s32 %s17, 2
        // Predicated region
        $region45: #{tpu_custom_call.1} parent=43 // pred_check
          %p1791 = pneg %p112
        $region46: #{tpu_custom_call.1} parent=43 // pred_check_branch
          %1793 = sbr.rel (%p1791) target = $region48
        $region47: #{tpu_custom_call.1} parent=43 // pred_region
          %s1794 = smul.u32 64, %s28
          %p1795 = scmp.lt.s32.totalorder %s1794, 255
          %s1796 = scalar_select %p1795, %s1794, 255
          %p1797 = scmp.lt.s32.totalorder %s29, 0
          %s1798 = scalar_select %p1797, %s29, 0
          %s1799 = sadd.s32 %s1798, %s1796
          %s1800 = smul.addr %s1799, 4
          %s1801 = scalar_lea.vmem %s2, %s1800
        $region48: #{tpu_custom_call.1} parent=43 // pred_fallthru
          _
        // Predicated region
        $region49: #{tpu_custom_call.1} parent=43 // pred_check
          %p1802 = pneg %p140
        $region50: #{tpu_custom_call.1} parent=43 // pred_check_branch
          %1804 = sbr.rel (%p1802) target = $region52
        $region51: #{tpu_custom_call.1} parent=43 // pred_region
          %s1805 = sand.u32 %s125, 1
          %s1806 = scalar_lea.sflag [#allocation3], %s1805
          %s1807 = sand.u32 %s125, 1
          %s1808 = scalar_lea.vmem [#allocation2], %s1807
          %1809 = dma.done %s1806, 16
        $region52: #{tpu_custom_call.1} parent=43 // pred_fallthru
          _
        // Predicated region
        $region53: #{tpu_custom_call.1} parent=43 // pred_check
          %p1810 = pneg %p168
        $region54: #{tpu_custom_call.1} parent=43 // pred_check_branch
          %1812 = sbr.rel (%p1810) target = $region56
        $region55: #{tpu_custom_call.1} parent=43 // pred_region
          %s1813 = sand.u32 %s153, 1
          %s1814 = scalar_lea.sflag [#allocation5], %s1813
          %s1815 = sand.u32 %s153, 1
          %s1816 = scalar_lea.vmem [#allocation4], %s1815
          %1817 = dma.done %s1814, 16
        $region56: #{tpu_custom_call.1} parent=43 // pred_fallthru
          _
      $region44: #{tpu_custom_call.1} parent=5 // pred_fallthru
        _
    $region6: #{tpu_custom_call.1} parent=1 // loop_footer
      %s21 = sadd.s32 1, %s17
    $region7: #{tpu_custom_call.1} parent=1 // loop_footer_branch
      %16 = sbr.rel target = $region3
    $region8: #{tpu_custom_call.1} parent=1 // loop_exit
      _
    %1818 = vsyncpa [#allocation3], 1
    %s1819 = scalar_lea.sflag [#allocation3], 1
    %1820 = vsyncpa %s1819, 1
    %1821 = vsyncpa [#allocation5], 1
    %s1822 = scalar_lea.sflag [#allocation5], 1
    %1823 = vsyncpa %s1822, 1

</llo_original>
